<compile_context>
chip_gen: v7x
topology: tpu7x:2x2x1
jax: 0.10.0
libtpu: 0.0.40
codegen_flags: <defaults>
</compile_context>

<pallas_src>
import math

import jax
import jax.numpy as jnp
from jax.experimental import pallas as pl
from jax.experimental.pallas import tpu as pltpu


def _round_up(x: int, m: int) -> int:
    return ((x + m - 1) // m) * m


def _pick_tile_k(d_in: int, max_tile_k: int = 2048):
    """Pick a lane-aligned fc6 K tile that minimizes padded reduction columns."""
    d128 = _round_up(d_in, 128)
    best_key = None
    best = (128, d128)
    cand = 128
    limit = min(max_tile_k, d128)
    while cand <= limit:
        d_pad = _round_up(d128, cand)
        key = (d_pad - d128, -cand)  # least waste first, then largest tile
        if best_key is None or key < best_key:
            best_key, best = key, (cand, d_pad)
        cand += 128
    return best  # (tile_k, d_pad)


def _vmem_limit_bytes() -> int:
    """Generation-aware VMEM cap: ~3/4 of physical, <= 100 MiB."""
    try:
        cap = int(pltpu.get_tpu_info().vmem_capacity_bytes)
    except Exception:
        cap = 64 * 1024 * 1024  # conservative (v7x per-TC VMEM)
    return min((cap * 3) // 4, 100 * 1024 * 1024)


def _resident_spec(block_shape, index_map, single_buffer: bool):
    """BlockSpec for operands whose block never changes (constant index_map).

    Single-buffer them (no second VMEM copy) when this JAX supports
    pipeline_mode=pl.Buffered(1); otherwise fall back to the default spec.
    """
    if single_buffer and hasattr(pl, "Buffered"):
        try:
            return pl.BlockSpec(block_shape, index_map, pipeline_mode=pl.Buffered(1))
        except TypeError:
            pass
    return pl.BlockSpec(block_shape, index_map)


def _two_mlp_head_kernel(x_ref, w6_ref, b6_ref, w7_ref, b7_ref, o_ref, acc_ref):
    """Grid = (N tiles, K tiles); K (fc6 reduction) is the last, 'arbitrary' axis."""
    k = pl.program_id(1)

    @pl.when(k == 0)
    def _():
        acc_ref[...] = jnp.zeros_like(acc_ref)

    # fc6 partial product for this K tile (bf16 operands, f32 accumulation).
    acc_ref[...] += jnp.dot(
        x_ref[...], w6_ref[...], preferred_element_type=jnp.float32
    )

    @pl.when(k == pl.num_programs(1) - 1)
    def _():
        # bias + ReLU in f32 on the per-tile accumulator.
        h = jnp.maximum(acc_ref[...] + b6_ref[...], 0.0)
        # Fused fc7 (+ bias, ReLU); w7/b7 are resident in VMEM across the grid.
        y = jnp.dot(h.astype(w7_ref.dtype), w7_ref[...],
                    preferred_element_type=jnp.float32)
        y = jnp.maximum(y + b7_ref[...], 0.0)
        o_ref[...] = y.astype(o_ref.dtype)


def make_two_mlp_head(w6, b6, w7, b7, *, tile_n=256, max_tile_k=2048,
                      out_dtype=None):
    """One-time setup: casts/pads weights to bf16 hardware tiles and returns a
    forward(x_nchw) closure (the per-call hot path).

    w6: (in_channels, representation_size), b6: (R,), w7: (R, R), b7: (R,).
    """
    d_in, r = w6.shape
    r_pad = _round_up(r, 128)
    tile_k, d_pad = _pick_tile_k(d_in, max_tile_k)

    # One-time weight cast + pad (hoisted out of the per-call path). Zero
    # padding keeps the math exact: padded K rows contribute 0, padded R
    # columns are sliced off at the end.
    w6_p = jnp.pad(w6.astype(jnp.bfloat16), ((0, d_pad - d_in), (0, r_pad - r)))
    w7_p = jnp.pad(w7.astype(jnp.bfloat16), ((0, r_pad - r), (0, r_pad - r)))
    b6_p = jnp.pad(b6.astype(jnp.float32), (0, r_pad - r)).reshape(1, r_pad)
    b7_p = jnp.pad(b7.astype(jnp.float32), (0, r_pad - r)).reshape(1, r_pad)

    vmem_limit = _vmem_limit_bytes()

    def forward(x_nchw):
        n = x_nchw.shape[0]
        assert math.prod(x_nchw.shape[1:]) == d_in, "flattened size mismatch"
        odt = jnp.dtype(out_dtype) if out_dtype is not None else x_nchw.dtype

        # bf16 packs 16 rows per sublane group -> round row tile to 16.
        tn = min(tile_n, _round_up(n, 16))
        n_pad = _round_up(n, tn)

        x2d = x_nchw.reshape(n, d_in).astype(jnp.bfloat16)
        if (n_pad, d_pad) != (n, d_in):
            x2d = jnp.pad(x2d, ((0, n_pad - n), (0, d_pad - d_in)))

        grid = (n_pad // tn, d_pad // tile_k)

        flops = 2 * n_pad * (d_pad * r_pad + r_pad * r_pad)
        bytes_accessed = (
            n_pad * d_pad * 2                     # x (bf16)
            + grid[0] * d_pad * r_pad * 2         # w6, re-streamed once per N tile
            + r_pad * r_pad * 2                   # w7 (resident)
            + 2 * r_pad * 4                       # biases
            + n_pad * r_pad * jnp.dtype(odt).itemsize
        )

        def run(single_buffer_residents):
            return pl.pallas_call(
                _two_mlp_head_kernel,
                out_shape=jax.ShapeDtypeStruct((n_pad, r_pad), odt),
                grid=grid,
                in_specs=[
                    pl.BlockSpec((tn, tile_k), lambda i, k: (i, k)),    # x tile
                    pl.BlockSpec((tile_k, r_pad), lambda i, k: (k, 0)),  # w6 K-tile
                    _resident_spec((1, r_pad), lambda i, k: (0, 0),
                                   single_buffer_residents),             # b6
                    _resident_spec((r_pad, r_pad), lambda i, k: (0, 0),
                                   single_buffer_residents),             # w7
                    _resident_spec((1, r_pad), lambda i, k: (0, 0),
                                   single_buffer_residents),             # b7
                ],
                out_specs=pl.BlockSpec((tn, r_pad), lambda i, k: (i, 0)),
                scratch_shapes=[pltpu.VMEM((tn, r_pad), jnp.float32)],
                compiler_params=pltpu.CompilerParams(
                    dimension_semantics=("parallel", "arbitrary"),
                    vmem_limit_bytes=vmem_limit,
                ),
                cost_estimate=pl.CostEstimate(
                    flops=flops, transcendentals=0,
                    bytes_accessed=bytes_accessed),
            )(x2d, w6_p, b6_p, w7_p, b7_p)

        try:
            out = run(True)
        except Exception:
            # Fallback if this JAX build rejects single-buffered residents.
            out = run(False)

        return out[:n, :r].astype(odt)

    return forward


def two_mlp_head(x_nchw, w6, b6, w7, b7, **kwargs):
    """Convenience one-shot wrapper (prep + forward). Prefer make_two_mlp_head
    + reusing the returned closure when calling repeatedly."""
    return make_two_mlp_head(w6, b6, w7, b7, **kwargs)(x_nchw)


def _reference_bf16(x_nchw, w6, b6, w7, b7):
    """Pure-JAX reference with the same bf16-operand / f32-accumulate recipe."""
    x = x_nchw.reshape(x_nchw.shape[0], -1).astype(jnp.bfloat16)
    h = jnp.dot(x, w6.astype(jnp.bfloat16), preferred_element_type=jnp.float32)
    h = jnp.maximum(h + b6.astype(jnp.float32), 0.0)
    y = jnp.dot(h.astype(jnp.bfloat16), w7.astype(jnp.bfloat16),
                preferred_element_type=jnp.float32)
    return jnp.maximum(y + b7.astype(jnp.float32), 0.0)


if __name__ == "__main__":
    key = jax.random.PRNGKey(0)
    k_x, k_w6, k_b6, k_w7, k_b7 = jax.random.split(key, 5)

    # Small but tile-friendly shapes: N=2, C=4, H=W=16 -> in_channels=1024, R=128.
    N, C, H, W = 2, 4, 16, 16
    D_IN = C * H * W
    R = 128

    x = jax.random.normal(k_x, (N, C, H, W), dtype=jnp.float32)
    # PyTorch Linear params, stored transposed: (in, out).
    w6 = jax.random.normal(k_w6, (D_IN, R), dtype=jnp.float32) * 0.05
    b6 = jax.random.normal(k_b6, (R,), dtype=jnp.float32) * 0.05
    w7 = jax.random.normal(k_w7, (R, R), dtype=jnp.float32) * 0.05
    b7 = jax.random.normal(k_b7, (R,), dtype=jnp.float32) * 0.05

    # One-time prep (weight cast/pad), then the hot-path forward.
    head = make_two_mlp_head(w6, b6, w7, b7)
    out = jax.block_until_ready(head(x))

    ref = _reference_bf16(x, w6, b6, w7, b7)
    assert out.shape == (N, R), f"bad shape {out.shape}"
    assert jnp.allclose(out.astype(jnp.float32), ref, atol=1e-2, rtol=1e-2), \
        "mismatch vs reference"

    print("KERNEL_OK")
</pallas_src>

<mosaic_0001>
module attributes {stable_mosaic.version = 11 : i64} {
  func.func @_two_mlp_head_kernel(%arg0: i32, %arg1: i32, %arg2: memref<16x1024xbf16, #tpu.memory_space<vmem>>, %arg3: memref<1024x128xbf16, #tpu.memory_space<vmem>>, %arg4: memref<1x128xf32, #tpu.memory_space<vmem>>, %arg5: memref<128x128xbf16, #tpu.memory_space<vmem>>, %arg6: memref<1x128xf32, #tpu.memory_space<vmem>>, %arg7: memref<16x128xf32, #tpu.memory_space<vmem>>, %arg8: memref<16x128xf32, #tpu.memory_space<vmem>>) attributes {dimension_semantics = [#tpu.dimension_semantics<parallel>, #tpu.dimension_semantics<arbitrary>], iteration_bounds = array<i64: 1, 1>, scalar_prefetch = 0 : i64, scratch_operands = 1 : i64, tpu.core_type = #tpu.core_type<tc>, window_params = [{transform_indices = @transform_0, window_bounds = array<i64: 16, 1024>}, {transform_indices = @transform_1, window_bounds = array<i64: 1024, 128>}, {pipeline_mode = #tpu.pipeline_mode<synchronous>, transform_indices = @transform_2, window_bounds = array<i64: 1, 128>}, {pipeline_mode = #tpu.pipeline_mode<synchronous>, transform_indices = @transform_3, window_bounds = array<i64: 128, 128>}, {pipeline_mode = #tpu.pipeline_mode<synchronous>, transform_indices = @transform_4, window_bounds = array<i64: 1, 128>}, {transform_indices = @transform_5, window_bounds = array<i64: 16, 128>}]} {
    %c0_i32 = arith.constant 0 : i32
    %0 = arith.cmpi eq, %arg1, %c0_i32 : i32
    %1 = arith.extui %0 : i1 to i32
    %c0_i32_0 = arith.constant 0 : i32
    %2 = arith.cmpi ne, %1, %c0_i32_0 : i32
    scf.if %2 {
      %cst_10 = arith.constant 0.000000e+00 : f32
      %12 = vector.broadcast %cst_10 : f32 to vector<16x128xf32>
      %c0_11 = arith.constant 0 : index
      %c0_12 = arith.constant 0 : index
      %13 = vector.load %arg8[%c0_11, %c0_12] : memref<16x128xf32, #tpu.memory_space<vmem>>, vector<16x128xf32>
      tpu.vector_store %arg8[%c0_11, %c0_12], %12 {strides = array<i32>} : memref<16x128xf32, #tpu.memory_space<vmem>>, vector<16x128xf32>,
    } else {
    }
    %c0 = arith.constant 0 : index
    %c0_1 = arith.constant 0 : index
    %3 = vector.load %arg8[%c0, %c0_1] : memref<16x128xf32, #tpu.memory_space<vmem>>, vector<16x128xf32>
    %c0_2 = arith.constant 0 : index
    %c0_3 = arith.constant 0 : index
    %4 = vector.load %arg2[%c0_2, %c0_3] : memref<16x1024xbf16, #tpu.memory_space<vmem>>, vector<16x1024xbf16>
    %c0_4 = arith.constant 0 : index
    %c0_5 = arith.constant 0 : index
    %5 = vector.load %arg3[%c0_4, %c0_5] : memref<1024x128xbf16, #tpu.memory_space<vmem>>, vector<1024x128xbf16>
    %cst = arith.constant dense<0.000000e+00> : vector<16x128xf32>
    %6 = tpu.matmul %4, %5, %cst {dimension_numbers = #tpu.dot_dimension_numbers<[1], [0], [0], [1], [0, 0, 1, 1], [], []>} : vector<16x1024xbf16>, vector<1024x128xbf16>, vector<16x128xf32> -> vector<16x128xf32>
    %7 = arith.addf %3, %6 : vector<16x128xf32>
    %c0_6 = arith.constant 0 : index
    %c0_7 = arith.constant 0 : index
    %8 = vector.load %arg8[%c0_6, %c0_7] : memref<16x128xf32, #tpu.memory_space<vmem>>, vector<16x128xf32>
    tpu.vector_store %arg8[%c0_6, %c0_7], %7 {strides = array<i32>} : memref<16x128xf32, #tpu.memory_space<vmem>>, vector<16x128xf32>,
    %c0_i32_8 = arith.constant 0 : i32
    %9 = arith.cmpi eq, %arg1, %c0_i32_8 : i32
    %10 = arith.extui %9 : i1 to i32
    %c0_i32_9 = arith.constant 0 : i32
    %11 = arith.cmpi ne, %10, %c0_i32_9 : i32
    scf.if %11 {
      %c0_10 = arith.constant 0 : index
      %c0_11 = arith.constant 0 : index
      %12 = vector.load %arg8[%c0_10, %c0_11] : memref<16x128xf32, #tpu.memory_space<vmem>>, vector<16x128xf32>
      %c0_12 = arith.constant 0 : index
      %c0_13 = arith.constant 0 : index
      %13 = vector.load %arg4[%c0_12, %c0_13] : memref<1x128xf32, #tpu.memory_space<vmem>>, vector<1x128xf32>
      %14 = vector.broadcast %13 : vector<1x128xf32> to vector<16x128xf32>
      %15 = arith.addf %12, %14 : vector<16x128xf32>
      %cst_14 = arith.constant 0.000000e+00 : f32
      %16 = vector.broadcast %cst_14 : f32 to vector<16x128xf32>
      %17 = arith.maximumf %15, %16 : vector<16x128xf32>
      %18 = arith.truncf %17 : vector<16x128xf32> to vector<16x128xbf16>
      %c0_15 = arith.constant 0 : index
      %c0_16 = arith.constant 0 : index
      %19 = vector.load %arg5[%c0_15, %c0_16] : memref<128x128xbf16, #tpu.memory_space<vmem>>, vector<128x128xbf16>
      %cst_17 = arith.constant dense<0.000000e+00> : vector<16x128xf32>
      %20 = tpu.matmul %18, %19, %cst_17 {dimension_numbers = #tpu.dot_dimension_numbers<[1], [0], [0], [1], [0, 0, 1, 1], [], []>} : vector<16x128xbf16>, vector<128x128xbf16>, vector<16x128xf32> -> vector<16x128xf32>
      %c0_18 = arith.constant 0 : index
      %c0_19 = arith.constant 0 : index
      %21 = vector.load %arg6[%c0_18, %c0_19] : memref<1x128xf32, #tpu.memory_space<vmem>>, vector<1x128xf32>
      %22 = vector.broadcast %21 : vector<1x128xf32> to vector<16x128xf32>
      %23 = arith.addf %20, %22 : vector<16x128xf32>
      %cst_20 = arith.constant 0.000000e+00 : f32
      %24 = vector.broadcast %cst_20 : f32 to vector<16x128xf32>
      %25 = arith.maximumf %23, %24 : vector<16x128xf32>
      %c0_21 = arith.constant 0 : index
      %c0_22 = arith.constant 0 : index
      %26 = vector.load %arg7[%c0_21, %c0_22] : memref<16x128xf32, #tpu.memory_space<vmem>>, vector<16x128xf32>
      tpu.vector_store %arg7[%c0_21, %c0_22], %25 {strides = array<i32>} : memref<16x128xf32, #tpu.memory_space<vmem>>, vector<16x128xf32>,
    } else {
    }
    return
  }
  func.func @transform_0(%arg0: i32, %arg1: i32) -> (i32, i32) {
    %c0_i32 = arith.constant 0 : i32
    return %arg0, %arg1 : i32, i32
  }
  func.func @transform_1(%arg0: i32, %arg1: i32) -> (i32, i32) {
    %c0_i32 = arith.constant 0 : i32
    %c0_i32_0 = arith.constant 0 : i32
    return %arg1, %c0_i32 : i32, i32
  }
  func.func @transform_2(%arg0: i32, %arg1: i32) -> (i32, i32) {
    %c0_i32 = arith.constant 0 : i32
    %c0_i32_0 = arith.constant 0 : i32
    %c0_i32_1 = arith.constant 0 : i32
    return %c0_i32, %c0_i32_0 : i32, i32
  }
  func.func @transform_3(%arg0: i32, %arg1: i32) -> (i32, i32) {
    %c0_i32 = arith.constant 0 : i32
    %c0_i32_0 = arith.constant 0 : i32
    %c0_i32_1 = arith.constant 0 : i32
    return %c0_i32, %c0_i32_0 : i32, i32
  }
  func.func @transform_4(%arg0: i32, %arg1: i32) -> (i32, i32) {
    %c0_i32 = arith.constant 0 : i32
    %c0_i32_0 = arith.constant 0 : i32
    %c0_i32_1 = arith.constant 0 : i32
    return %c0_i32, %c0_i32_0 : i32, i32
  }
  func.func @transform_5(%arg0: i32, %arg1: i32) -> (i32, i32) {
    %c0_i32 = arith.constant 0 : i32
    %c0_i32_0 = arith.constant 0 : i32
    return %arg0, %c0_i32 : i32, i32
  }
}

module attributes {stable_mosaic.version = 11 : i64} {
  func.func @_two_mlp_head_kernel(%arg0: i32, %arg1: i32, %arg2: memref<16x1024xbf16, #tpu.memory_space<vmem>>, %arg3: memref<1024x128xbf16, #tpu.memory_space<vmem>>, %arg4: memref<1x128xf32, #tpu.memory_space<vmem>>, %arg5: memref<128x128xbf16, #tpu.memory_space<vmem>>, %arg6: memref<1x128xf32, #tpu.memory_space<vmem>>, %arg7: memref<16x128xf32, #tpu.memory_space<vmem>>, %arg8: memref<16x128xf32, #tpu.memory_space<vmem>>) attributes {dimension_semantics = [#tpu.dimension_semantics<parallel>, #tpu.dimension_semantics<arbitrary>], iteration_bounds = array<i64: 1, 1>, scalar_prefetch = 0 : i64, scratch_operands = 1 : i64, tpu.core_type = #tpu.core_type<tc>, window_params = [{transform_indices = @transform_0, window_bounds = array<i64: 16, 1024>}, {transform_indices = @transform_1, window_bounds = array<i64: 1024, 128>}, {pipeline_mode = #tpu.pipeline_mode<synchronous>, transform_indices = @transform_2, window_bounds = array<i64: 1, 128>}, {pipeline_mode = #tpu.pipeline_mode<synchronous>, transform_indices = @transform_3, window_bounds = array<i64: 128, 128>}, {pipeline_mode = #tpu.pipeline_mode<synchronous>, transform_indices = @transform_4, window_bounds = array<i64: 1, 128>}, {transform_indices = @transform_5, window_bounds = array<i64: 16, 128>}]} {
    %c0_i32 = arith.constant 0 : i32
    %0 = arith.cmpi eq, %arg1, %c0_i32 : i32
    %1 = arith.extui %0 : i1 to i32
    %c0_i32_0 = arith.constant 0 : i32
    %2 = arith.cmpi ne, %1, %c0_i32_0 : i32
    scf.if %2 {
      %cst_10 = arith.constant 0.000000e+00 : f32
      %12 = vector.broadcast %cst_10 : f32 to vector<16x128xf32>
      %c0_11 = arith.constant 0 : index
      %c0_12 = arith.constant 0 : index
      %13 = vector.load %arg8[%c0_11, %c0_12] : memref<16x128xf32, #tpu.memory_space<vmem>>, vector<16x128xf32>
      tpu.vector_store %arg8[%c0_11, %c0_12], %12 {strides = array<i32>} : memref<16x128xf32, #tpu.memory_space<vmem>>, vector<16x128xf32>,
    } else {
    }
    %c0 = arith.constant 0 : index
    %c0_1 = arith.constant 0 : index
    %3 = vector.load %arg8[%c0, %c0_1] : memref<16x128xf32, #tpu.memory_space<vmem>>, vector<16x128xf32>
    %c0_2 = arith.constant 0 : index
    %c0_3 = arith.constant 0 : index
    %4 = vector.load %arg2[%c0_2, %c0_3] : memref<16x1024xbf16, #tpu.memory_space<vmem>>, vector<16x1024xbf16>
    %c0_4 = arith.constant 0 : index
    %c0_5 = arith.constant 0 : index
    %5 = vector.load %arg3[%c0_4, %c0_5] : memref<1024x128xbf16, #tpu.memory_space<vmem>>, vector<1024x128xbf16>
    %cst = arith.constant dense<0.000000e+00> : vector<16x128xf32>
    %6 = tpu.matmul %4, %5, %cst {dimension_numbers = #tpu.dot_dimension_numbers<[1], [0], [0], [1], [0, 0, 1, 1], [], []>} : vector<16x1024xbf16>, vector<1024x128xbf16>, vector<16x128xf32> -> vector<16x128xf32>
    %7 = arith.addf %3, %6 : vector<16x128xf32>
    %c0_6 = arith.constant 0 : index
    %c0_7 = arith.constant 0 : index
    %8 = vector.load %arg8[%c0_6, %c0_7] : memref<16x128xf32, #tpu.memory_space<vmem>>, vector<16x128xf32>
    tpu.vector_store %arg8[%c0_6, %c0_7], %7 {strides = array<i32>} : memref<16x128xf32, #tpu.memory_space<vmem>>, vector<16x128xf32>,
    %c0_i32_8 = arith.constant 0 : i32
    %9 = arith.cmpi eq, %arg1, %c0_i32_8 : i32
    %10 = arith.extui %9 : i1 to i32
    %c0_i32_9 = arith.constant 0 : i32
    %11 = arith.cmpi ne, %10, %c0_i32_9 : i32
    scf.if %11 {
      %c0_10 = arith.constant 0 : index
      %c0_11 = arith.constant 0 : index
      %12 = vector.load %arg8[%c0_10, %c0_11] : memref<16x128xf32, #tpu.memory_space<vmem>>, vector<16x128xf32>
      %c0_12 = arith.constant 0 : index
      %c0_13 = arith.constant 0 : index
      %13 = vector.load %arg4[%c0_12, %c0_13] : memref<1x128xf32, #tpu.memory_space<vmem>>, vector<1x128xf32>
      %14 = vector.broadcast %13 : vector<1x128xf32> to vector<16x128xf32>
      %15 = arith.addf %12, %14 : vector<16x128xf32>
      %cst_14 = arith.constant 0.000000e+00 : f32
      %16 = vector.broadcast %cst_14 : f32 to vector<16x128xf32>
      %17 = arith.maximumf %15, %16 : vector<16x128xf32>
      %18 = arith.truncf %17 : vector<16x128xf32> to vector<16x128xbf16>
      %c0_15 = arith.constant 0 : index
      %c0_16 = arith.constant 0 : index
      %19 = vector.load %arg5[%c0_15, %c0_16] : memref<128x128xbf16, #tpu.memory_space<vmem>>, vector<128x128xbf16>
      %cst_17 = arith.constant dense<0.000000e+00> : vector<16x128xf32>
      %20 = tpu.matmul %18, %19, %cst_17 {dimension_numbers = #tpu.dot_dimension_numbers<[1], [0], [0], [1], [0, 0, 1, 1], [], []>} : vector<16x128xbf16>, vector<128x128xbf16>, vector<16x128xf32> -> vector<16x128xf32>
      %c0_18 = arith.constant 0 : index
      %c0_19 = arith.constant 0 : index
      %21 = vector.load %arg6[%c0_18, %c0_19] : memref<1x128xf32, #tpu.memory_space<vmem>>, vector<1x128xf32>
      %22 = vector.broadcast %21 : vector<1x128xf32> to vector<16x128xf32>
      %23 = arith.addf %20, %22 : vector<16x128xf32>
      %cst_20 = arith.constant 0.000000e+00 : f32
      %24 = vector.broadcast %cst_20 : f32 to vector<16x128xf32>
      %25 = arith.maximumf %23, %24 : vector<16x128xf32>
      %c0_21 = arith.constant 0 : index
      %c0_22 = arith.constant 0 : index
      %26 = vector.load %arg7[%c0_21, %c0_22] : memref<16x128xf32, #tpu.memory_space<vmem>>, vector<16x128xf32>
      tpu.vector_store %arg7[%c0_21, %c0_22], %25 {strides = array<i32>} : memref<16x128xf32, #tpu.memory_space<vmem>>, vector<16x128xf32>,
    } else {
    }
    return
  }
  func.func @transform_0(%arg0: i32, %arg1: i32) -> (i32, i32) {
    %c0_i32 = arith.constant 0 : i32
    return %arg0, %arg1 : i32, i32
  }
  func.func @transform_1(%arg0: i32, %arg1: i32) -> (i32, i32) {
    %c0_i32 = arith.constant 0 : i32
    %c0_i32_0 = arith.constant 0 : i32
    return %arg1, %c0_i32 : i32, i32
  }
  func.func @transform_2(%arg0: i32, %arg1: i32) -> (i32, i32) {
    %c0_i32 = arith.constant 0 : i32
    %c0_i32_0 = arith.constant 0 : i32
    %c0_i32_1 = arith.constant 0 : i32
    return %c0_i32, %c0_i32_0 : i32, i32
  }
  func.func @transform_3(%arg0: i32, %arg1: i32) -> (i32, i32) {
    %c0_i32 = arith.constant 0 : i32
    %c0_i32_0 = arith.constant 0 : i32
    %c0_i32_1 = arith.constant 0 : i32
    return %c0_i32, %c0_i32_0 : i32, i32
  }
  func.func @transform_4(%arg0: i32, %arg1: i32) -> (i32, i32) {
    %c0_i32 = arith.constant 0 : i32
    %c0_i32_0 = arith.constant 0 : i32
    %c0_i32_1 = arith.constant 0 : i32
    return %c0_i32, %c0_i32_0 : i32, i32
  }
  func.func @transform_5(%arg0: i32, %arg1: i32) -> (i32, i32) {
    %c0_i32 = arith.constant 0 : i32
    %c0_i32_0 = arith.constant 0 : i32
    return %arg0, %c0_i32 : i32, i32
  }
}

</mosaic_0001>

<llo_original>
// kernel: tpu_custom_call.1
$region0: #{tpu_custom_call.1}
  #allocation0 [shape = 'u32[]', space=smem, size = 0x4, offset = 0x4, fixed_abs, tag = 'smem constant byte address 0x4 - core index']
  #allocation1 [shape = 'u32[144,128]{1,0:T(1,128)}', space=vmem, size = 0x12000, scoped, tag = 'internal scratch']
  #allocation2 [shape = 'f32[16,128]{1,0:T(8,128)}', space=vmem, size = 0x2000, scoped, tag = 'scratch operand']
  %s0 = inlined_call_operand.hbm [shape: bf16[16,1024], index: 0, kind: input, shape index: {}]
  %s1 = inlined_call_operand.hbm [shape: bf16[1024,128], index: 1, kind: input, shape index: {}]
  %s2 = inlined_call_operand.vmem [shape: f32[1,128], index: 2, kind: input, shape index: {}]
  %s3 = inlined_call_operand.hbm [shape: bf16[128,128], index: 3, kind: input, shape index: {}]
  %s4 = inlined_call_operand.vmem [shape: f32[1,128], index: 4, kind: input, shape index: {}]
  %s5 = inlined_call_operand.hbm [shape: f32[16,128], index: 5, kind: output, shape index: {}]
  %s6 = sld [smem:[#allocation0]]
  $region50: #{tpu_custom_call.1} parent=0
    _
  %s8 = ssub.s32 1, %s6
  %s9 = scalar_select 0, %s8, %s6
  $region1: #{tpu_custom_call.1} parent=0
    #allocation3 [shape = 'u8[32768]{0}', space=vmem, size = 0x8000, scoped, tag = 'input window, operand 0, single buffered']
    #allocation4 [shape = 's32[1]{0}', space=sflag, size = 0x4, scoped, tag = 'scoped memory for tpu_custom_call.1']
    #allocation5 [shape = 's32[1]{0}', space=sflag, size = 0x4, scoped, tag = 'scoped memory for tpu_custom_call.1']
    #allocation6 [shape = 'u8[262144]{0}', space=vmem, size = 0x40000, scoped, tag = 'input window, operand 1, single buffered']
    #allocation7 [shape = 's32[1]{0}', space=sflag, size = 0x4, scoped, tag = 'scoped memory for tpu_custom_call.1']
    #allocation8 [shape = 'u8[32768]{0}', space=vmem, size = 0x8000, scoped, tag = 'input window, operand 3, single buffered']
    #allocation9 [shape = 'u8[8192]{0}', space=vmem, size = 0x2000, scoped, tag = 'output window, operand 0, single buffered']
    %10 = vsyncpa [#allocation4], 0
    %11 = vsyncpa [#allocation7], 0
    %12 = vsyncpa [#allocation5], 0
    // Predicated region
    $region2: #{tpu_custom_call.1} parent=1 // pred_check
      _
    $region3: #{tpu_custom_call.1} parent=1 // pred_check_branch
      %14 = sbr.rel (0) target = $region5
    $region4: #{tpu_custom_call.1} parent=1 // pred_region
      %s16 = ssub.s32 1024, 1024
      %17 = vsyncadd [#allocation4], %s16
      %s18 = sshll.u32 [#allocation3], 4
      %s19 = int_to_ptr.vmem [resolvable:$true] %s18
      %24 = dma.hbm_to_vmem [thread:$0]  %s0, 1024, %s19, [#allocation4], 512, 512, 32
    $region5: #{tpu_custom_call.1} parent=1 // pred_fallthru
      _
    // Predicated region
    $region6: #{tpu_custom_call.1} parent=1 // pred_check
      _
    $region7: #{tpu_custom_call.1} parent=1 // pred_check_branch
      %26 = sbr.rel (0) target = $region9
    $region8: #{tpu_custom_call.1} parent=1 // pred_region
      %s28 = ssub.s32 8192, 8192
      %29 = vsyncadd [#allocation7], %s28
      %s30 = sshll.u32 [#allocation6], 4
      %s31 = int_to_ptr.vmem [resolvable:$true] %s30
      %36 = dma.hbm_to_vmem [thread:$0]  %s1, 8192, %s31, [#allocation7], 64, 64, 4
    $region9: #{tpu_custom_call.1} parent=1 // pred_fallthru
      _
    // Predicated region
    $region10: #{tpu_custom_call.1} parent=1 // pred_check
      _
    $region11: #{tpu_custom_call.1} parent=1 // pred_check_branch
      %38 = sbr.rel (0) target = $region13
    $region12: #{tpu_custom_call.1} parent=1 // pred_region
      _
    $region13: #{tpu_custom_call.1} parent=1 // pred_fallthru
      _
    // Predicated region
    $region14: #{tpu_custom_call.1} parent=1 // pred_check
      _
    $region15: #{tpu_custom_call.1} parent=1 // pred_check_branch
      %40 = sbr.rel (0) target = $region17
    $region16: #{tpu_custom_call.1} parent=1 // pred_region
      %s42 = ssub.s32 1024, 1024
      %43 = vsyncadd [#allocation7], %s42
      %s44 = sshll.u32 [#allocation8], 4
      %s45 = int_to_ptr.vmem [resolvable:$true] %s44
      %50 = dma.hbm_to_vmem [thread:$0]  %s3, 1024, %s45, [#allocation7], 64, 64, 4
    $region17: #{tpu_custom_call.1} parent=1 // pred_fallthru
      _
    // Predicated region
    $region18: #{tpu_custom_call.1} parent=1 // pred_check
      _
    $region19: #{tpu_custom_call.1} parent=1 // pred_check_branch
      %52 = sbr.rel (0) target = $region21
    $region20: #{tpu_custom_call.1} parent=1 // pred_region
      _
    $region21: #{tpu_custom_call.1} parent=1 // pred_fallthru
      _
    // Predicated region
    $region22: #{tpu_custom_call.1} parent=1 // pred_check
      _
    $region23: #{tpu_custom_call.1} parent=1 // pred_check_branch
      %54 = sbr.rel (0) target = $region25
    $region24: #{tpu_custom_call.1} parent=1 // pred_region
      %55 = dma.done [#allocation4], 1024
    $region25: #{tpu_custom_call.1} parent=1 // pred_fallthru
      _
    // Predicated region
    $region26: #{tpu_custom_call.1} parent=1 // pred_check
      _
    $region27: #{tpu_custom_call.1} parent=1 // pred_check_branch
      %57 = sbr.rel (0) target = $region29
    $region28: #{tpu_custom_call.1} parent=1 // pred_region
      %58 = dma.done [#allocation7], 8192
    $region29: #{tpu_custom_call.1} parent=1 // pred_fallthru
      _
    // Predicated region
    $region30: #{tpu_custom_call.1} parent=1 // pred_check
      _
    $region31: #{tpu_custom_call.1} parent=1 // pred_check_branch
      %60 = sbr.rel (0) target = $region33
    $region32: #{tpu_custom_call.1} parent=1 // pred_region
      %61 = dma.done [#allocation7], 1024
    $region33: #{tpu_custom_call.1} parent=1 // pred_fallthru
      _
    %p63 = scmp.eq.s32.totalorder 0, 0
    // Predicated region
    $region34: #{tpu_custom_call.1} parent=1 // pred_check
      %p64 = pneg %p63
    $region35: #{tpu_custom_call.1} parent=1 // pred_check_branch
      %66 = sbr.rel (%p64) target = $region37
    $region36: #{tpu_custom_call.1} parent=1 // pred_region
      %67 = vst [vmem:[#allocation2] sm:$0xff] 0.0
      %68 = vst [vmem:[#allocation2 + $0x8] sm:$0xff] 0.0
    $region37: #{tpu_custom_call.1} parent=1 // pred_fallthru
      _
    %v69 = vld [vmem:[#allocation2] sm:$0xff]
    %v70 = vld [vmem:[#allocation2 + $0x8] sm:$0xff]
    %v71 = vld [vmem:[#allocation3] sm:$0xff]
    %v72 = vld [vmem:[#allocation3 + $0x8] sm:$0xff]
    %v73 = vld [vmem:[#allocation3 + $0x10] sm:$0xff]
    %v74 = vld [vmem:[#allocation3 + $0x18] sm:$0xff]
    %v75 = vld [vmem:[#allocation3 + $0x20] sm:$0xff]
    %v76 = vld [vmem:[#allocation3 + $0x28] sm:$0xff]
    %v77 = vld [vmem:[#allocation3 + $0x30] sm:$0xff]
    %v78 = vld [vmem:[#allocation3 + $0x38] sm:$0xff]
    %v79 = vld [vmem:[#allocation6] sm:$0xf]
    %v80 = vld [vmem:[#allocation6 + $0x4] sm:$0xf]
    %v81 = vld [vmem:[#allocation6 + $0x8] sm:$0xf]
    %v82 = vld [vmem:[#allocation6 + $0xc] sm:$0xf]
    %v83 = vld [vmem:[#allocation6 + $0x10] sm:$0xf]
    %v84 = vld [vmem:[#allocation6 + $0x14] sm:$0xf]
    %v85 = vld [vmem:[#allocation6 + $0x18] sm:$0xf]
    %v86 = vld [vmem:[#allocation6 + $0x1c] sm:$0xf]
    %v87 = vld [vmem:[#allocation6 + $0x20] sm:$0xf]
    %v88 = vld [vmem:[#allocation6 + $0x24] sm:$0xf]
    %v89 = vld [vmem:[#allocation6 + $0x28] sm:$0xf]
    %v90 = vld [vmem:[#allocation6 + $0x2c] sm:$0xf]
    %v91 = vld [vmem:[#allocation6 + $0x30] sm:$0xf]
    %v92 = vld [vmem:[#allocation6 + $0x34] sm:$0xf]
    %v93 = vld [vmem:[#allocation6 + $0x38] sm:$0xf]
    %v94 = vld [vmem:[#allocation6 + $0x3c] sm:$0xf]
    %v95 = vld [vmem:[#allocation6 + $0x40] sm:$0xf]
    %v96 = vld [vmem:[#allocation6 + $0x44] sm:$0xf]
    %v97 = vld [vmem:[#allocation6 + $0x48] sm:$0xf]
    %v98 = vld [vmem:[#allocation6 + $0x4c] sm:$0xf]
    %v99 = vld [vmem:[#allocation6 + $0x50] sm:$0xf]
    %v100 = vld [vmem:[#allocation6 + $0x54] sm:$0xf]
    %v101 = vld [vmem:[#allocation6 + $0x58] sm:$0xf]
    %v102 = vld [vmem:[#allocation6 + $0x5c] sm:$0xf]
    %v103 = vld [vmem:[#allocation6 + $0x60] sm:$0xf]
    %v104 = vld [vmem:[#allocation6 + $0x64] sm:$0xf]
    %v105 = vld [vmem:[#allocation6 + $0x68] sm:$0xf]
    %v106 = vld [vmem:[#allocation6 + $0x6c] sm:$0xf]
    %v107 = vld [vmem:[#allocation6 + $0x70] sm:$0xf]
    %v108 = vld [vmem:[#allocation6 + $0x74] sm:$0xf]
    %v109 = vld [vmem:[#allocation6 + $0x78] sm:$0xf]
    %v110 = vld [vmem:[#allocation6 + $0x7c] sm:$0xf]
    %v111 = vld [vmem:[#allocation6 + $0x80] sm:$0xf]
    %v112 = vld [vmem:[#allocation6 + $0x84] sm:$0xf]
    %v113 = vld [vmem:[#allocation6 + $0x88] sm:$0xf]
    %v114 = vld [vmem:[#allocation6 + $0x8c] sm:$0xf]
    %v115 = vld [vmem:[#allocation6 + $0x90] sm:$0xf]
    %v116 = vld [vmem:[#allocation6 + $0x94] sm:$0xf]
    %v117 = vld [vmem:[#allocation6 + $0x98] sm:$0xf]
    %v118 = vld [vmem:[#allocation6 + $0x9c] sm:$0xf]
    %v119 = vld [vmem:[#allocation6 + $0xa0] sm:$0xf]
    %v120 = vld [vmem:[#allocation6 + $0xa4] sm:$0xf]
    %v121 = vld [vmem:[#allocation6 + $0xa8] sm:$0xf]
    %v122 = vld [vmem:[#allocation6 + $0xac] sm:$0xf]
    %v123 = vld [vmem:[#allocation6 + $0xb0] sm:$0xf]
    %v124 = vld [vmem:[#allocation6 + $0xb4] sm:$0xf]
    %v125 = vld [vmem:[#allocation6 + $0xb8] sm:$0xf]
    %v126 = vld [vmem:[#allocation6 + $0xbc] sm:$0xf]
    %v127 = vld [vmem:[#allocation6 + $0xc0] sm:$0xf]
    %v128 = vld [vmem:[#allocation6 + $0xc4] sm:$0xf]
    %v129 = vld [vmem:[#allocation6 + $0xc8] sm:$0xf]
    %v130 = vld [vmem:[#allocation6 + $0xcc] sm:$0xf]
    %v131 = vld [vmem:[#allocation6 + $0xd0] sm:$0xf]
    %v132 = vld [vmem:[#allocation6 + $0xd4] sm:$0xf]
    %v133 = vld [vmem:[#allocation6 + $0xd8] sm:$0xf]
    %v134 = vld [vmem:[#allocation6 + $0xdc] sm:$0xf]
    %v135 = vld [vmem:[#allocation6 + $0xe0] sm:$0xf]
    %v136 = vld [vmem:[#allocation6 + $0xe4] sm:$0xf]
    %v137 = vld [vmem:[#allocation6 + $0xe8] sm:$0xf]
    %v138 = vld [vmem:[#allocation6 + $0xec] sm:$0xf]
    %v139 = vld [vmem:[#allocation6 + $0xf0] sm:$0xf]
    %v140 = vld [vmem:[#allocation6 + $0xf4] sm:$0xf]
    %v141 = vld [vmem:[#allocation6 + $0xf8] sm:$0xf]
    %v142 = vld [vmem:[#allocation6 + $0xfc] sm:$0xf]
    %v143 = vld [vmem:[#allocation6 + $0x100] sm:$0xf]
    %v144 = vld [vmem:[#allocation6 + $0x104] sm:$0xf]
    %v145 = vld [vmem:[#allocation6 + $0x108] sm:$0xf]
    %v146 = vld [vmem:[#allocation6 + $0x10c] sm:$0xf]
    %v147 = vld [vmem:[#allocation6 + $0x110] sm:$0xf]
    %v148 = vld [vmem:[#allocation6 + $0x114] sm:$0xf]
    %v149 = vld [vmem:[#allocation6 + $0x118] sm:$0xf]
    %v150 = vld [vmem:[#allocation6 + $0x11c] sm:$0xf]
    %v151 = vld [vmem:[#allocation6 + $0x120] sm:$0xf]
    %v152 = vld [vmem:[#allocation6 + $0x124] sm:$0xf]
    %v153 = vld [vmem:[#allocation6 + $0x128] sm:$0xf]
    %v154 = vld [vmem:[#allocation6 + $0x12c] sm:$0xf]
    %v155 = vld [vmem:[#allocation6 + $0x130] sm:$0xf]
    %v156 = vld [vmem:[#allocation6 + $0x134] sm:$0xf]
    %v157 = vld [vmem:[#allocation6 + $0x138] sm:$0xf]
    %v158 = vld [vmem:[#allocation6 + $0x13c] sm:$0xf]
    %v159 = vld [vmem:[#allocation6 + $0x140] sm:$0xf]
    %v160 = vld [vmem:[#allocation6 + $0x144] sm:$0xf]
    %v161 = vld [vmem:[#allocation6 + $0x148] sm:$0xf]
    %v162 = vld [vmem:[#allocation6 + $0x14c] sm:$0xf]
    %v163 = vld [vmem:[#allocation6 + $0x150] sm:$0xf]
    %v164 = vld [vmem:[#allocation6 + $0x154] sm:$0xf]
    %v165 = vld [vmem:[#allocation6 + $0x158] sm:$0xf]
    %v166 = vld [vmem:[#allocation6 + $0x15c] sm:$0xf]
    %v167 = vld [vmem:[#allocation6 + $0x160] sm:$0xf]
    %v168 = vld [vmem:[#allocation6 + $0x164] sm:$0xf]
    %v169 = vld [vmem:[#allocation6 + $0x168] sm:$0xf]
    %v170 = vld [vmem:[#allocation6 + $0x16c] sm:$0xf]
    %v171 = vld [vmem:[#allocation6 + $0x170] sm:$0xf]
    %v172 = vld [vmem:[#allocation6 + $0x174] sm:$0xf]
    %v173 = vld [vmem:[#allocation6 + $0x178] sm:$0xf]
    %v174 = vld [vmem:[#allocation6 + $0x17c] sm:$0xf]
    %v175 = vld [vmem:[#allocation6 + $0x180] sm:$0xf]
    %v176 = vld [vmem:[#allocation6 + $0x184] sm:$0xf]
    %v177 = vld [vmem:[#allocation6 + $0x188] sm:$0xf]
    %v178 = vld [vmem:[#allocation6 + $0x18c] sm:$0xf]
    %v179 = vld [vmem:[#allocation6 + $0x190] sm:$0xf]
    %v180 = vld [vmem:[#allocation6 + $0x194] sm:$0xf]
    %v181 = vld [vmem:[#allocation6 + $0x198] sm:$0xf]
    %v182 = vld [vmem:[#allocation6 + $0x19c] sm:$0xf]
    %v183 = vld [vmem:[#allocation6 + $0x1a0] sm:$0xf]
    %v184 = vld [vmem:[#allocation6 + $0x1a4] sm:$0xf]
    %v185 = vld [vmem:[#allocation6 + $0x1a8] sm:$0xf]
    %v186 = vld [vmem:[#allocation6 + $0x1ac] sm:$0xf]
    %v187 = vld [vmem:[#allocation6 + $0x1b0] sm:$0xf]
    %v188 = vld [vmem:[#allocation6 + $0x1b4] sm:$0xf]
    %v189 = vld [vmem:[#allocation6 + $0x1b8] sm:$0xf]
    %v190 = vld [vmem:[#allocation6 + $0x1bc] sm:$0xf]
    %v191 = vld [vmem:[#allocation6 + $0x1c0] sm:$0xf]
    %v192 = vld [vmem:[#allocation6 + $0x1c4] sm:$0xf]
    %v193 = vld [vmem:[#allocation6 + $0x1c8] sm:$0xf]
    %v194 = vld [vmem:[#allocation6 + $0x1cc] sm:$0xf]
    %v195 = vld [vmem:[#allocation6 + $0x1d0] sm:$0xf]
    %v196 = vld [vmem:[#allocation6 + $0x1d4] sm:$0xf]
    %v197 = vld [vmem:[#allocation6 + $0x1d8] sm:$0xf]
    %v198 = vld [vmem:[#allocation6 + $0x1dc] sm:$0xf]
    %v199 = vld [vmem:[#allocation6 + $0x1e0] sm:$0xf]
    %v200 = vld [vmem:[#allocation6 + $0x1e4] sm:$0xf]
    %v201 = vld [vmem:[#allocation6 + $0x1e8] sm:$0xf]
    %v202 = vld [vmem:[#allocation6 + $0x1ec] sm:$0xf]
    %v203 = vld [vmem:[#allocation6 + $0x1f0] sm:$0xf]
    %v204 = vld [vmem:[#allocation6 + $0x1f4] sm:$0xf]
    %v205 = vld [vmem:[#allocation6 + $0x1f8] sm:$0xf]
    %v206 = vld [vmem:[#allocation6 + $0x1fc] sm:$0xf]
    %v215 = vunpack.c.l.b16 %v71
    %v216 = vunpack.c.h.b16 %v71
    %v217 = vunpack.c.l.b16 %v72
    %v218 = vunpack.c.h.b16 %v72
    %v219 = vunpack.c.l.b16 %v73
    %v220 = vunpack.c.h.b16 %v73
    %v221 = vunpack.c.l.b16 %v74
    %v222 = vunpack.c.h.b16 %v74
    %v223 = vunpack.c.l.b16 %v75
    %v224 = vunpack.c.h.b16 %v75
    %v225 = vunpack.c.l.b16 %v76
    %v226 = vunpack.c.h.b16 %v76
    %v227 = vunpack.c.l.b16 %v77
    %v228 = vunpack.c.h.b16 %v77
    %v229 = vunpack.c.l.b16 %v78
    %v230 = vunpack.c.h.b16 %v78
    %v231 = vpack.c.b16 %v223, %v215
    %v232 = vpack.c.b16 %v224, %v216
    %v233 = vpack.c.b16 %v225, %v217
    %v234 = vpack.c.b16 %v226, %v218
    %v235 = vpack.c.b16 %v227, %v219
    %v236 = vpack.c.b16 %v228, %v220
    %v237 = vpack.c.b16 %v229, %v221
    %v238 = vpack.c.b16 %v230, %v222
    %v375 = vunpack.c.l.b16 %v79
    %v376 = vunpack.c.l.b16 %v80
    %v377 = vunpack.c.l.b16 %v81
    %v378 = vunpack.c.l.b16 %v82
    %v379 = vunpack.c.l.b16 %v83
    %v380 = vunpack.c.l.b16 %v84
    %v381 = vunpack.c.l.b16 %v85
    %v382 = vunpack.c.l.b16 %v86
    %v383 = vunpack.c.l.b16 %v87
    %v384 = vunpack.c.l.b16 %v88
    %v385 = vunpack.c.l.b16 %v89
    %v386 = vunpack.c.l.b16 %v90
    %v387 = vunpack.c.l.b16 %v91
    %v388 = vunpack.c.l.b16 %v92
    %v389 = vunpack.c.l.b16 %v93
    %v390 = vunpack.c.l.b16 %v94
    %v391 = vunpack.c.l.b16 %v95
    %v392 = vunpack.c.l.b16 %v96
    %v393 = vunpack.c.l.b16 %v97
    %v394 = vunpack.c.l.b16 %v98
    %v395 = vunpack.c.l.b16 %v99
    %v396 = vunpack.c.l.b16 %v100
    %v397 = vunpack.c.l.b16 %v101
    %v398 = vunpack.c.l.b16 %v102
    %v399 = vunpack.c.l.b16 %v103
    %v400 = vunpack.c.l.b16 %v104
    %v401 = vunpack.c.l.b16 %v105
    %v402 = vunpack.c.l.b16 %v106
    %v403 = vunpack.c.l.b16 %v107
    %v404 = vunpack.c.l.b16 %v108
    %v405 = vunpack.c.l.b16 %v109
    %v406 = vunpack.c.l.b16 %v110
    %v407 = vunpack.c.l.b16 %v111
    %v408 = vunpack.c.l.b16 %v112
    %v409 = vunpack.c.l.b16 %v113
    %v410 = vunpack.c.l.b16 %v114
    %v411 = vunpack.c.l.b16 %v115
    %v412 = vunpack.c.l.b16 %v116
    %v413 = vunpack.c.l.b16 %v117
    %v414 = vunpack.c.l.b16 %v118
    %v415 = vunpack.c.l.b16 %v119
    %v416 = vunpack.c.l.b16 %v120
    %v417 = vunpack.c.l.b16 %v121
    %v418 = vunpack.c.l.b16 %v122
    %v419 = vunpack.c.l.b16 %v123
    %v420 = vunpack.c.l.b16 %v124
    %v421 = vunpack.c.l.b16 %v125
    %v422 = vunpack.c.l.b16 %v126
    %v423 = vunpack.c.l.b16 %v127
    %v424 = vunpack.c.l.b16 %v128
    %v425 = vunpack.c.l.b16 %v129
    %v426 = vunpack.c.l.b16 %v130
    %v427 = vunpack.c.l.b16 %v131
    %v428 = vunpack.c.l.b16 %v132
    %v429 = vunpack.c.l.b16 %v133
    %v430 = vunpack.c.l.b16 %v134
    %v431 = vunpack.c.l.b16 %v135
    %v432 = vunpack.c.l.b16 %v136
    %v433 = vunpack.c.l.b16 %v137
    %v434 = vunpack.c.l.b16 %v138
    %v435 = vunpack.c.l.b16 %v139
    %v436 = vunpack.c.l.b16 %v140
    %v437 = vunpack.c.l.b16 %v141
    %v438 = vunpack.c.l.b16 %v142
    %v439 = vunpack.c.l.b16 %v143
    %v440 = vunpack.c.l.b16 %v144
    %v441 = vunpack.c.l.b16 %v145
    %v442 = vunpack.c.l.b16 %v146
    %v443 = vunpack.c.l.b16 %v147
    %v444 = vunpack.c.l.b16 %v148
    %v445 = vunpack.c.l.b16 %v149
    %v446 = vunpack.c.l.b16 %v150
    %v447 = vunpack.c.l.b16 %v151
    %v448 = vunpack.c.l.b16 %v152
    %v449 = vunpack.c.l.b16 %v153
    %v450 = vunpack.c.l.b16 %v154
    %v451 = vunpack.c.l.b16 %v155
    %v452 = vunpack.c.l.b16 %v156
    %v453 = vunpack.c.l.b16 %v157
    %v454 = vunpack.c.l.b16 %v158
    %v455 = vunpack.c.l.b16 %v159
    %v456 = vunpack.c.l.b16 %v160
    %v457 = vunpack.c.l.b16 %v161
    %v458 = vunpack.c.l.b16 %v162
    %v459 = vunpack.c.l.b16 %v163
    %v460 = vunpack.c.l.b16 %v164
    %v461 = vunpack.c.l.b16 %v165
    %v462 = vunpack.c.l.b16 %v166
    %v463 = vunpack.c.l.b16 %v167
    %v464 = vunpack.c.l.b16 %v168
    %v465 = vunpack.c.l.b16 %v169
    %v466 = vunpack.c.l.b16 %v170
    %v467 = vunpack.c.l.b16 %v171
    %v468 = vunpack.c.l.b16 %v172
    %v469 = vunpack.c.l.b16 %v173
    %v470 = vunpack.c.l.b16 %v174
    %v471 = vunpack.c.l.b16 %v175
    %v472 = vunpack.c.l.b16 %v176
    %v473 = vunpack.c.l.b16 %v177
    %v474 = vunpack.c.l.b16 %v178
    %v475 = vunpack.c.l.b16 %v179
    %v476 = vunpack.c.l.b16 %v180
    %v477 = vunpack.c.l.b16 %v181
    %v478 = vunpack.c.l.b16 %v182
    %v479 = vunpack.c.l.b16 %v183
    %v480 = vunpack.c.l.b16 %v184
    %v481 = vunpack.c.l.b16 %v185
    %v482 = vunpack.c.l.b16 %v186
    %v483 = vunpack.c.l.b16 %v187
    %v484 = vunpack.c.l.b16 %v188
    %v485 = vunpack.c.l.b16 %v189
    %v486 = vunpack.c.l.b16 %v190
    %v487 = vunpack.c.l.b16 %v191
    %v488 = vunpack.c.l.b16 %v192
    %v489 = vunpack.c.l.b16 %v193
    %v490 = vunpack.c.l.b16 %v194
    %v491 = vunpack.c.l.b16 %v195
    %v492 = vunpack.c.l.b16 %v196
    %v493 = vunpack.c.l.b16 %v197
    %v494 = vunpack.c.l.b16 %v198
    %v495 = vunpack.c.l.b16 %v199
    %v496 = vunpack.c.l.b16 %v200
    %v497 = vunpack.c.l.b16 %v201
    %v498 = vunpack.c.l.b16 %v202
    %v499 = vunpack.c.l.b16 %v203
    %v500 = vunpack.c.l.b16 %v204
    %v501 = vunpack.c.l.b16 %v205
    %v502 = vunpack.c.l.b16 %v206
    %v503 = vpack.c.b16 %v376, %v375
    %v504 = vpack.c.b16 %v378, %v377
    %v505 = vpack.c.b16 %v380, %v379
    %v506 = vpack.c.b16 %v382, %v381
    %v507 = vpack.c.b16 %v384, %v383
    %v508 = vpack.c.b16 %v386, %v385
    %v509 = vpack.c.b16 %v388, %v387
    %v510 = vpack.c.b16 %v390, %v389
    %v511 = vpack.c.b16 %v392, %v391
    %v512 = vpack.c.b16 %v394, %v393
    %v513 = vpack.c.b16 %v396, %v395
    %v514 = vpack.c.b16 %v398, %v397
    %v515 = vpack.c.b16 %v400, %v399
    %v516 = vpack.c.b16 %v402, %v401
    %v517 = vpack.c.b16 %v404, %v403
    %v518 = vpack.c.b16 %v406, %v405
    %v519 = vpack.c.b16 %v408, %v407
    %v520 = vpack.c.b16 %v410, %v409
    %v521 = vpack.c.b16 %v412, %v411
    %v522 = vpack.c.b16 %v414, %v413
    %v523 = vpack.c.b16 %v416, %v415
    %v524 = vpack.c.b16 %v418, %v417
    %v525 = vpack.c.b16 %v420, %v419
    %v526 = vpack.c.b16 %v422, %v421
    %v527 = vpack.c.b16 %v424, %v423
    %v528 = vpack.c.b16 %v426, %v425
    %v529 = vpack.c.b16 %v428, %v427
    %v530 = vpack.c.b16 %v430, %v429
    %v531 = vpack.c.b16 %v432, %v431
    %v532 = vpack.c.b16 %v434, %v433
    %v533 = vpack.c.b16 %v436, %v435
    %v534 = vpack.c.b16 %v438, %v437
    %v535 = vpack.c.b16 %v440, %v439
    %v536 = vpack.c.b16 %v442, %v441
    %v537 = vpack.c.b16 %v444, %v443
    %v538 = vpack.c.b16 %v446, %v445
    %v539 = vpack.c.b16 %v448, %v447
    %v540 = vpack.c.b16 %v450, %v449
    %v541 = vpack.c.b16 %v452, %v451
    %v542 = vpack.c.b16 %v454, %v453
    %v543 = vpack.c.b16 %v456, %v455
    %v544 = vpack.c.b16 %v458, %v457
    %v545 = vpack.c.b16 %v460, %v459
    %v546 = vpack.c.b16 %v462, %v461
    %v547 = vpack.c.b16 %v464, %v463
    %v548 = vpack.c.b16 %v466, %v465
    %v549 = vpack.c.b16 %v468, %v467
    %v550 = vpack.c.b16 %v470, %v469
    %v551 = vpack.c.b16 %v472, %v471
    %v552 = vpack.c.b16 %v474, %v473
    %v553 = vpack.c.b16 %v476, %v475
    %v554 = vpack.c.b16 %v478, %v477
    %v555 = vpack.c.b16 %v480, %v479
    %v556 = vpack.c.b16 %v482, %v481
    %v557 = vpack.c.b16 %v484, %v483
    %v558 = vpack.c.b16 %v486, %v485
    %v559 = vpack.c.b16 %v488, %v487
    %v560 = vpack.c.b16 %v490, %v489
    %v561 = vpack.c.b16 %v492, %v491
    %v562 = vpack.c.b16 %v494, %v493
    %v563 = vpack.c.b16 %v496, %v495
    %v564 = vpack.c.b16 %v498, %v497
    %v565 = vpack.c.b16 %v500, %v499
    %v566 = vpack.c.b16 %v502, %v501
    %631 = vmatprep.subr.bf16.mxu0 0
    %632 = vmatpush1.bf16.msra.mxu0 %v503
    %633 = vmatprep.subr.bf16.mxu0 0
    %634 = vmatpush1.bf16.msra.mxu0 %v504
    %635 = vmatprep.subr.bf16.mxu0 0
    %636 = vmatpush1.bf16.msra.mxu0 %v505
    %637 = vmatprep.subr.bf16.mxu0 0
    %638 = vmatpush1.bf16.msra.mxu0 %v506
    %639 = vmatprep.subr.bf16.mxu0 0
    %640 = vmatpush1.bf16.msra.mxu0 %v507
    %641 = vmatprep.subr.bf16.mxu0 0
    %642 = vmatpush1.bf16.msra.mxu0 %v508
    %643 = vmatprep.subr.bf16.mxu0 0
    %644 = vmatpush1.bf16.msra.mxu0 %v509
    %645 = vmatprep.subr.bf16.mxu0 0
    %646 = vmatpush1.bf16.msra.mxu0 %v510
    %647 = vmatprep.subr.bf16.mxu0 0
    %648 = vmatpush1.bf16.msra.mxu0 %v511
    %649 = vmatprep.subr.bf16.mxu0 0
    %650 = vmatpush1.bf16.msra.mxu0 %v512
    %651 = vmatprep.subr.bf16.mxu0 0
    %652 = vmatpush1.bf16.msra.mxu0 %v513
    %653 = vmatprep.subr.bf16.mxu0 0
    %654 = vmatpush1.bf16.msra.mxu0 %v514
    %655 = vmatprep.subr.bf16.mxu0 0
    %656 = vmatpush1.bf16.msra.mxu0 %v515
    %657 = vmatprep.subr.bf16.mxu0 0
    %658 = vmatpush1.bf16.msra.mxu0 %v516
    %659 = vmatprep.subr.bf16.mxu0 0
    %660 = vmatpush1.bf16.msra.mxu0 %v517
    %661 = vmatprep.subr.bf16.mxu0 0
    %662 = vmatpush1.bf16.msra.mxu0 %v518
    %663 = vmatprep.mubr.bf16.mxu0 %v232
    %664 = vmatmul.mubr.bf16.gmra.mrb[0].mxu0 %v231
    %v665 = vpop.f32.mrb[0].mxu0
    %v666 = vadd.f32 0.0, %v665
    %v667 = vpop.f32.mrb[0].mxu0
    %v668 = vpop.f32.mrb[0].mxu0
    %v669 = vadd.f32 0.0, %v668
    %v670 = vpop.f32.mrb[0].mxu0
    %671 = vdwg.mxu0
    %672 = vmatprep.subr.bf16.mxu0 0
    %673 = vmatpush1.bf16.msra.mxu0 %v519
    %674 = vmatprep.subr.bf16.mxu0 0
    %675 = vmatpush1.bf16.msra.mxu0 %v520
    %676 = vmatprep.subr.bf16.mxu0 0
    %677 = vmatpush1.bf16.msra.mxu0 %v521
    %678 = vmatprep.subr.bf16.mxu0 0
    %679 = vmatpush1.bf16.msra.mxu0 %v522
    %680 = vmatprep.subr.bf16.mxu0 0
    %681 = vmatpush1.bf16.msra.mxu0 %v523
    %682 = vmatprep.subr.bf16.mxu0 0
    %683 = vmatpush1.bf16.msra.mxu0 %v524
    %684 = vmatprep.subr.bf16.mxu0 0
    %685 = vmatpush1.bf16.msra.mxu0 %v525
    %686 = vmatprep.subr.bf16.mxu0 0
    %687 = vmatpush1.bf16.msra.mxu0 %v526
    %688 = vmatprep.subr.bf16.mxu0 0
    %689 = vmatpush1.bf16.msra.mxu0 %v527
    %690 = vmatprep.subr.bf16.mxu0 0
    %691 = vmatpush1.bf16.msra.mxu0 %v528
    %692 = vmatprep.subr.bf16.mxu0 0
    %693 = vmatpush1.bf16.msra.mxu0 %v529
    %694 = vmatprep.subr.bf16.mxu0 0
    %695 = vmatpush1.bf16.msra.mxu0 %v530
    %696 = vmatprep.subr.bf16.mxu0 0
    %697 = vmatpush1.bf16.msra.mxu0 %v531
    %698 = vmatprep.subr.bf16.mxu0 0
    %699 = vmatpush1.bf16.msra.mxu0 %v532
    %700 = vmatprep.subr.bf16.mxu0 0
    %701 = vmatpush1.bf16.msra.mxu0 %v533
    %702 = vmatprep.subr.bf16.mxu0 0
    %703 = vmatpush1.bf16.msra.mxu0 %v534
    %704 = vmatprep.mubr.bf16.mxu0 %v234
    %705 = vmatmul.mubr.bf16.gmra.mrb[0].mxu0 %v233
    %v706 = vpop.f32.mrb[0].mxu0
    %v707 = vadd.f32 %v666, %v706
    %v708 = vpop.f32.mrb[0].mxu0
    %v709 = vpop.f32.mrb[0].mxu0
    %v710 = vadd.f32 %v669, %v709
    %v711 = vpop.f32.mrb[0].mxu0
    %712 = vdwg.mxu0
    %713 = vmatprep.subr.bf16.mxu0 0
    %714 = vmatpush1.bf16.msra.mxu0 %v535
    %715 = vmatprep.subr.bf16.mxu0 0
    %716 = vmatpush1.bf16.msra.mxu0 %v536
    %717 = vmatprep.subr.bf16.mxu0 0
    %718 = vmatpush1.bf16.msra.mxu0 %v537
    %719 = vmatprep.subr.bf16.mxu0 0
    %720 = vmatpush1.bf16.msra.mxu0 %v538
    %721 = vmatprep.subr.bf16.mxu0 0
    %722 = vmatpush1.bf16.msra.mxu0 %v539
    %723 = vmatprep.subr.bf16.mxu0 0
    %724 = vmatpush1.bf16.msra.mxu0 %v540
    %725 = vmatprep.subr.bf16.mxu0 0
    %726 = vmatpush1.bf16.msra.mxu0 %v541
    %727 = vmatprep.subr.bf16.mxu0 0
    %728 = vmatpush1.bf16.msra.mxu0 %v542
    %729 = vmatprep.subr.bf16.mxu0 0
    %730 = vmatpush1.bf16.msra.mxu0 %v543
    %731 = vmatprep.subr.bf16.mxu0 0
    %732 = vmatpush1.bf16.msra.mxu0 %v544
    %733 = vmatprep.subr.bf16.mxu0 0
    %734 = vmatpush1.bf16.msra.mxu0 %v545
    %735 = vmatprep.subr.bf16.mxu0 0
    %736 = vmatpush1.bf16.msra.mxu0 %v546
    %737 = vmatprep.subr.bf16.mxu0 0
    %738 = vmatpush1.bf16.msra.mxu0 %v547
    %739 = vmatprep.subr.bf16.mxu0 0
    %740 = vmatpush1.bf16.msra.mxu0 %v548
    %741 = vmatprep.subr.bf16.mxu0 0
    %742 = vmatpush1.bf16.msra.mxu0 %v549
    %743 = vmatprep.subr.bf16.mxu0 0
    %744 = vmatpush1.bf16.msra.mxu0 %v550
    %745 = vmatprep.mubr.bf16.mxu0 %v236
    %746 = vmatmul.mubr.bf16.gmra.mrb[0].mxu0 %v235
    %v747 = vpop.f32.mrb[0].mxu0
    %v748 = vadd.f32 %v707, %v747
    %v749 = vpop.f32.mrb[0].mxu0
    %v750 = vpop.f32.mrb[0].mxu0
    %v751 = vadd.f32 %v710, %v750
    %v752 = vpop.f32.mrb[0].mxu0
    %753 = vdwg.mxu0
    %754 = vmatprep.subr.bf16.mxu0 0
    %755 = vmatpush1.bf16.msra.mxu0 %v551
    %756 = vmatprep.subr.bf16.mxu0 0
    %757 = vmatpush1.bf16.msra.mxu0 %v552
    %758 = vmatprep.subr.bf16.mxu0 0
    %759 = vmatpush1.bf16.msra.mxu0 %v553
    %760 = vmatprep.subr.bf16.mxu0 0
    %761 = vmatpush1.bf16.msra.mxu0 %v554
    %762 = vmatprep.subr.bf16.mxu0 0
    %763 = vmatpush1.bf16.msra.mxu0 %v555
    %764 = vmatprep.subr.bf16.mxu0 0
    %765 = vmatpush1.bf16.msra.mxu0 %v556
    %766 = vmatprep.subr.bf16.mxu0 0
    %767 = vmatpush1.bf16.msra.mxu0 %v557
    %768 = vmatprep.subr.bf16.mxu0 0
    %769 = vmatpush1.bf16.msra.mxu0 %v558
    %770 = vmatprep.subr.bf16.mxu0 0
    %771 = vmatpush1.bf16.msra.mxu0 %v559
    %772 = vmatprep.subr.bf16.mxu0 0
    %773 = vmatpush1.bf16.msra.mxu0 %v560
    %774 = vmatprep.subr.bf16.mxu0 0
    %775 = vmatpush1.bf16.msra.mxu0 %v561
    %776 = vmatprep.subr.bf16.mxu0 0
    %777 = vmatpush1.bf16.msra.mxu0 %v562
    %778 = vmatprep.subr.bf16.mxu0 0
    %779 = vmatpush1.bf16.msra.mxu0 %v563
    %780 = vmatprep.subr.bf16.mxu0 0
    %781 = vmatpush1.bf16.msra.mxu0 %v564
    %782 = vmatprep.subr.bf16.mxu0 0
    %783 = vmatpush1.bf16.msra.mxu0 %v565
    %784 = vmatprep.subr.bf16.mxu0 0
    %785 = vmatpush1.bf16.msra.mxu0 %v566
    %786 = vmatprep.mubr.bf16.mxu0 %v238
    %787 = vmatmul.mubr.bf16.gmra.mrb[0].mxu0 %v237
    %v788 = vpop.f32.mrb[0].mxu0
    %v789 = vadd.f32 %v748, %v788
    %v790 = vpop.f32.mrb[0].mxu0
    %v791 = vpop.f32.mrb[0].mxu0
    %v792 = vadd.f32 %v751, %v791
    %v793 = vpop.f32.mrb[0].mxu0
    %794 = vdwg.mxu0
    %v795 = vadd.f32 %v69, %v789
    %v796 = vadd.f32 %v70, %v792
    %797 = vst [vmem:[#allocation2] sm:$0xff] %v795
    %798 = vst [vmem:[#allocation2 + $0x8] sm:$0xff] %v796
    // Predicated region
    $region38: #{tpu_custom_call.1} parent=1 // pred_check
      %p799 = pneg %p63
    $region39: #{tpu_custom_call.1} parent=1 // pred_check_branch
      %801 = sbr.rel (%p799) target = $region41
    $region40: #{tpu_custom_call.1} parent=1 // pred_region
      %v802 = vld [vmem:[#allocation2] sm:$0xff]
      %v803 = vld [vmem:[#allocation2 + $0x8] sm:$0xff]
      %v804 = vld [vmem:[%s2] sm:$0x1]
      %v806 = vlaneseq
      %v807 = vshrl.u32 %v806, 7
      %v808 = vsub.s32 0, %v807
      %v809 = vrot.slane %v804, %v808
      %v811 = vadd.f32 %v802, %v809
      %v812 = vadd.f32 %v803, %v809
      %v813 = vmax.f32 %v811, 0.0
      %v814 = vmax.f32 %v812, 0.0
      %v815 = vpack.c.bf16 %v814, %v813
      %v816 = vld [vmem:[#allocation8] sm:$0xf]
      %v817 = vld [vmem:[#allocation8 + $0x4] sm:$0xf]
      %v818 = vld [vmem:[#allocation8 + $0x8] sm:$0xf]
      %v819 = vld [vmem:[#allocation8 + $0xc] sm:$0xf]
      %v820 = vld [vmem:[#allocation8 + $0x10] sm:$0xf]
      %v821 = vld [vmem:[#allocation8 + $0x14] sm:$0xf]
      %v822 = vld [vmem:[#allocation8 + $0x18] sm:$0xf]
      %v823 = vld [vmem:[#allocation8 + $0x1c] sm:$0xf]
      %v824 = vld [vmem:[#allocation8 + $0x20] sm:$0xf]
      %v825 = vld [vmem:[#allocation8 + $0x24] sm:$0xf]
      %v826 = vld [vmem:[#allocation8 + $0x28] sm:$0xf]
      %v827 = vld [vmem:[#allocation8 + $0x2c] sm:$0xf]
      %v828 = vld [vmem:[#allocation8 + $0x30] sm:$0xf]
      %v829 = vld [vmem:[#allocation8 + $0x34] sm:$0xf]
      %v830 = vld [vmem:[#allocation8 + $0x38] sm:$0xf]
      %v831 = vld [vmem:[#allocation8 + $0x3c] sm:$0xf]
      %v832 = vld [vmem:[%s4] sm:$0x1]
      %v834 = vlaneseq
      %v835 = vshrl.u32 %v834, 7
      %v836 = vsub.s32 0, %v835
      %v837 = vrot.slane %v832, %v836
      %v855 = vunpack.c.l.b16 %v816
      %v856 = vunpack.c.l.b16 %v817
      %v857 = vunpack.c.l.b16 %v818
      %v858 = vunpack.c.l.b16 %v819
      %v859 = vunpack.c.l.b16 %v820
      %v860 = vunpack.c.l.b16 %v821
      %v861 = vunpack.c.l.b16 %v822
      %v862 = vunpack.c.l.b16 %v823
      %v863 = vunpack.c.l.b16 %v824
      %v864 = vunpack.c.l.b16 %v825
      %v865 = vunpack.c.l.b16 %v826
      %v866 = vunpack.c.l.b16 %v827
      %v867 = vunpack.c.l.b16 %v828
      %v868 = vunpack.c.l.b16 %v829
      %v869 = vunpack.c.l.b16 %v830
      %v870 = vunpack.c.l.b16 %v831
      %v871 = vpack.c.b16 %v856, %v855
      %v872 = vpack.c.b16 %v858, %v857
      %v873 = vpack.c.b16 %v860, %v859
      %v874 = vpack.c.b16 %v862, %v861
      %v875 = vpack.c.b16 %v864, %v863
      %v876 = vpack.c.b16 %v866, %v865
      %v877 = vpack.c.b16 %v868, %v867
      %v878 = vpack.c.b16 %v870, %v869
      %887 = vmatprep.subr.bf16.mxu0 0
      %888 = vmatpush1.bf16.msra.mxu0 %v871
      %889 = vmatprep.subr.bf16.mxu0 0
      %890 = vmatpush1.bf16.msra.mxu0 %v872
      %891 = vmatprep.subr.bf16.mxu0 0
      %892 = vmatpush1.bf16.msra.mxu0 %v873
      %893 = vmatprep.subr.bf16.mxu0 0
      %894 = vmatpush1.bf16.msra.mxu0 %v874
      %895 = vmatprep.subr.bf16.mxu0 0
      %896 = vmatpush1.bf16.msra.mxu0 %v875
      %897 = vmatprep.subr.bf16.mxu0 0
      %898 = vmatpush1.bf16.msra.mxu0 %v876
      %899 = vmatprep.subr.bf16.mxu0 0
      %900 = vmatpush1.bf16.msra.mxu0 %v877
      %901 = vmatprep.subr.bf16.mxu0 0
      %902 = vmatpush1.bf16.msra.mxu0 %v878
      %903 = vmatprep.subr.bf16.mxu0 0
      %904 = vmatpush1.bf16.msra.mxu0 0
      %905 = vmatprep.subr.bf16.mxu0 0
      %906 = vmatpush1.bf16.msra.mxu0 0
      %907 = vmatprep.subr.bf16.mxu0 0
      %908 = vmatpush1.bf16.msra.mxu0 0
      %909 = vmatprep.subr.bf16.mxu0 0
      %910 = vmatpush1.bf16.msra.mxu0 0
      %911 = vmatprep.subr.bf16.mxu0 0
      %912 = vmatpush1.bf16.msra.mxu0 0
      %913 = vmatprep.subr.bf16.mxu0 0
      %914 = vmatpush1.bf16.msra.mxu0 0
      %915 = vmatprep.subr.bf16.mxu0 0
      %916 = vmatpush1.bf16.msra.mxu0 0
      %917 = vmatprep.subr.bf16.mxu0 0
      %918 = vmatpush1.bf16.msra.mxu0 0
      %919 = vmatprep.mubr.bf16.mxu0 0
      %920 = vmatmul.mubr.bf16.gmra.mrb[0].mxu0 %v815
      %v921 = vpop.f32.mrb[0].mxu0
      %v922 = vadd.f32 %v837, %v921
      %v923 = vpop.f32.mrb[0].mxu0
      %v924 = vpop.f32.mrb[0].mxu0
      %v925 = vadd.f32 %v837, %v924
      %v926 = vpop.f32.mrb[0].mxu0
      %927 = vdwg.mxu0
      %v928 = vmax.f32 %v922, 0.0
      %v929 = vmax.f32 %v925, 0.0
      %930 = vst [vmem:[#allocation9] sm:$0xff] %v928
      %931 = vst [vmem:[#allocation9 + $0x8] sm:$0xff] %v929
    $region41: #{tpu_custom_call.1} parent=1 // pred_fallthru
      _
    // Predicated region
    $region42: #{tpu_custom_call.1} parent=1 // pred_check
      _
    $region43: #{tpu_custom_call.1} parent=1 // pred_check_branch
      %933 = sbr.rel (0) target = $region45
    $region44: #{tpu_custom_call.1} parent=1 // pred_region
      %s935 = ssub.s32 256, 256
      %936 = vsyncadd [#allocation5], %s935
      %s937 = sshll.u32 [#allocation9], 4
      %s938 = int_to_ptr.vmem [resolvable:$true] %s937
      %943 = dma.vmem_to_hbm [thread:$0]  %s938, 256, %s5, [#allocation5], 128, 128, 8
    $region45: #{tpu_custom_call.1} parent=1 // pred_fallthru
      _
    // Predicated region
    $region46: #{tpu_custom_call.1} parent=1 // pred_check
      _
    $region47: #{tpu_custom_call.1} parent=1 // pred_check_branch
      %945 = sbr.rel (0) target = $region49
    $region48: #{tpu_custom_call.1} parent=1 // pred_region
      %946 = dma.done [#allocation5], 256
    $region49: #{tpu_custom_call.1} parent=1 // pred_fallthru
      _
    %947 = vsyncpa [#allocation4], 1
    %948 = vsyncpa [#allocation7], 1
    %949 = vsyncpa [#allocation5], 1

// kernel: tpu_custom_call.1
$region0: #{tpu_custom_call.1}
  #allocation0 [shape = 'u32[]', space=smem, size = 0x4, offset = 0x4, fixed_abs, tag = 'smem constant byte address 0x4 - core index']
  #allocation1 [shape = 'u32[144,128]{1,0:T(1,128)}', space=vmem, size = 0x12000, scoped, tag = 'internal scratch']
  #allocation2 [shape = 'f32[16,128]{1,0:T(8,128)}', space=vmem, size = 0x2000, scoped, tag = 'scratch operand']
  %s0 = inlined_call_operand.hbm [shape: bf16[16,1024], index: 0, kind: input, shape index: {}]
  %s1 = inlined_call_operand.hbm [shape: bf16[1024,128], index: 1, kind: input, shape index: {}]
  %s2 = inlined_call_operand.vmem [shape: f32[1,128], index: 2, kind: input, shape index: {}]
  %s3 = inlined_call_operand.hbm [shape: bf16[128,128], index: 3, kind: input, shape index: {}]
  %s4 = inlined_call_operand.vmem [shape: f32[1,128], index: 4, kind: input, shape index: {}]
  %s5 = inlined_call_operand.hbm [shape: f32[16,128], index: 5, kind: output, shape index: {}]
  %s6 = sld [smem:[#allocation0]]
  $region50: #{tpu_custom_call.1} parent=0
    _
  %s8 = ssub.s32 1, %s6
  %s9 = scalar_select 0, %s8, %s6
  $region1: #{tpu_custom_call.1} parent=0
    #allocation3 [shape = 'u8[32768]{0}', space=vmem, size = 0x8000, scoped, tag = 'input window, operand 0, single buffered']
    #allocation4 [shape = 's32[1]{0}', space=sflag, size = 0x4, scoped, tag = 'scoped memory for tpu_custom_call.1']
    #allocation5 [shape = 's32[1]{0}', space=sflag, size = 0x4, scoped, tag = 'scoped memory for tpu_custom_call.1']
    #allocation6 [shape = 'u8[262144]{0}', space=vmem, size = 0x40000, scoped, tag = 'input window, operand 1, single buffered']
    #allocation7 [shape = 's32[1]{0}', space=sflag, size = 0x4, scoped, tag = 'scoped memory for tpu_custom_call.1']
    #allocation8 [shape = 'u8[32768]{0}', space=vmem, size = 0x8000, scoped, tag = 'input window, operand 3, single buffered']
    #allocation9 [shape = 'u8[8192]{0}', space=vmem, size = 0x2000, scoped, tag = 'output window, operand 0, single buffered']
    %10 = vsyncpa [#allocation4], 0
    %11 = vsyncpa [#allocation7], 0
    %12 = vsyncpa [#allocation5], 0
    // Predicated region
    $region2: #{tpu_custom_call.1} parent=1 // pred_check
      _
    $region3: #{tpu_custom_call.1} parent=1 // pred_check_branch
      %14 = sbr.rel (0) target = $region5
    $region4: #{tpu_custom_call.1} parent=1 // pred_region
      %s16 = ssub.s32 1024, 1024
      %17 = vsyncadd [#allocation4], %s16
      %s18 = sshll.u32 [#allocation3], 4
      %s19 = int_to_ptr.vmem [resolvable:$true] %s18
      %24 = dma.hbm_to_vmem [thread:$0]  %s0, 1024, %s19, [#allocation4], 512, 512, 32
    $region5: #{tpu_custom_call.1} parent=1 // pred_fallthru
      _
    // Predicated region
    $region6: #{tpu_custom_call.1} parent=1 // pred_check
      _
    $region7: #{tpu_custom_call.1} parent=1 // pred_check_branch
      %26 = sbr.rel (0) target = $region9
    $region8: #{tpu_custom_call.1} parent=1 // pred_region
      %s28 = ssub.s32 8192, 8192
      %29 = vsyncadd [#allocation7], %s28
      %s30 = sshll.u32 [#allocation6], 4
      %s31 = int_to_ptr.vmem [resolvable:$true] %s30
      %36 = dma.hbm_to_vmem [thread:$0]  %s1, 8192, %s31, [#allocation7], 64, 64, 4
    $region9: #{tpu_custom_call.1} parent=1 // pred_fallthru
      _
    // Predicated region
    $region10: #{tpu_custom_call.1} parent=1 // pred_check
      _
    $region11: #{tpu_custom_call.1} parent=1 // pred_check_branch
      %38 = sbr.rel (0) target = $region13
    $region12: #{tpu_custom_call.1} parent=1 // pred_region
      _
    $region13: #{tpu_custom_call.1} parent=1 // pred_fallthru
      _
    // Predicated region
    $region14: #{tpu_custom_call.1} parent=1 // pred_check
      _
    $region15: #{tpu_custom_call.1} parent=1 // pred_check_branch
      %40 = sbr.rel (0) target = $region17
    $region16: #{tpu_custom_call.1} parent=1 // pred_region
      %s42 = ssub.s32 1024, 1024
      %43 = vsyncadd [#allocation7], %s42
      %s44 = sshll.u32 [#allocation8], 4
      %s45 = int_to_ptr.vmem [resolvable:$true] %s44
      %50 = dma.hbm_to_vmem [thread:$0]  %s3, 1024, %s45, [#allocation7], 64, 64, 4
    $region17: #{tpu_custom_call.1} parent=1 // pred_fallthru
      _
    // Predicated region
    $region18: #{tpu_custom_call.1} parent=1 // pred_check
      _
    $region19: #{tpu_custom_call.1} parent=1 // pred_check_branch
      %52 = sbr.rel (0) target = $region21
    $region20: #{tpu_custom_call.1} parent=1 // pred_region
      _
    $region21: #{tpu_custom_call.1} parent=1 // pred_fallthru
      _
    // Predicated region
    $region22: #{tpu_custom_call.1} parent=1 // pred_check
      _
    $region23: #{tpu_custom_call.1} parent=1 // pred_check_branch
      %54 = sbr.rel (0) target = $region25
    $region24: #{tpu_custom_call.1} parent=1 // pred_region
      %55 = dma.done [#allocation4], 1024
    $region25: #{tpu_custom_call.1} parent=1 // pred_fallthru
      _
    // Predicated region
    $region26: #{tpu_custom_call.1} parent=1 // pred_check
      _
    $region27: #{tpu_custom_call.1} parent=1 // pred_check_branch
      %57 = sbr.rel (0) target = $region29
    $region28: #{tpu_custom_call.1} parent=1 // pred_region
      %58 = dma.done [#allocation7], 8192
    $region29: #{tpu_custom_call.1} parent=1 // pred_fallthru
      _
    // Predicated region
    $region30: #{tpu_custom_call.1} parent=1 // pred_check
      _
    $region31: #{tpu_custom_call.1} parent=1 // pred_check_branch
      %60 = sbr.rel (0) target = $region33
    $region32: #{tpu_custom_call.1} parent=1 // pred_region
      %61 = dma.done [#allocation7], 1024
    $region33: #{tpu_custom_call.1} parent=1 // pred_fallthru
      _
    %p63 = scmp.eq.s32.totalorder 0, 0
    // Predicated region
    $region34: #{tpu_custom_call.1} parent=1 // pred_check
      %p64 = pneg %p63
    $region35: #{tpu_custom_call.1} parent=1 // pred_check_branch
      %66 = sbr.rel (%p64) target = $region37
    $region36: #{tpu_custom_call.1} parent=1 // pred_region
      %67 = vst [vmem:[#allocation2] sm:$0xff] 0.0
      %68 = vst [vmem:[#allocation2 + $0x8] sm:$0xff] 0.0
    $region37: #{tpu_custom_call.1} parent=1 // pred_fallthru
      _
    %v69 = vld [vmem:[#allocation2] sm:$0xff]
    %v70 = vld [vmem:[#allocation2 + $0x8] sm:$0xff]
    %v71 = vld [vmem:[#allocation3] sm:$0xff]
    %v72 = vld [vmem:[#allocation3 + $0x8] sm:$0xff]
    %v73 = vld [vmem:[#allocation3 + $0x10] sm:$0xff]
    %v74 = vld [vmem:[#allocation3 + $0x18] sm:$0xff]
    %v75 = vld [vmem:[#allocation3 + $0x20] sm:$0xff]
    %v76 = vld [vmem:[#allocation3 + $0x28] sm:$0xff]
    %v77 = vld [vmem:[#allocation3 + $0x30] sm:$0xff]
    %v78 = vld [vmem:[#allocation3 + $0x38] sm:$0xff]
    %v79 = vld [vmem:[#allocation6] sm:$0xf]
    %v80 = vld [vmem:[#allocation6 + $0x4] sm:$0xf]
    %v81 = vld [vmem:[#allocation6 + $0x8] sm:$0xf]
    %v82 = vld [vmem:[#allocation6 + $0xc] sm:$0xf]
    %v83 = vld [vmem:[#allocation6 + $0x10] sm:$0xf]
    %v84 = vld [vmem:[#allocation6 + $0x14] sm:$0xf]
    %v85 = vld [vmem:[#allocation6 + $0x18] sm:$0xf]
    %v86 = vld [vmem:[#allocation6 + $0x1c] sm:$0xf]
    %v87 = vld [vmem:[#allocation6 + $0x20] sm:$0xf]
    %v88 = vld [vmem:[#allocation6 + $0x24] sm:$0xf]
    %v89 = vld [vmem:[#allocation6 + $0x28] sm:$0xf]
    %v90 = vld [vmem:[#allocation6 + $0x2c] sm:$0xf]
    %v91 = vld [vmem:[#allocation6 + $0x30] sm:$0xf]
    %v92 = vld [vmem:[#allocation6 + $0x34] sm:$0xf]
    %v93 = vld [vmem:[#allocation6 + $0x38] sm:$0xf]
    %v94 = vld [vmem:[#allocation6 + $0x3c] sm:$0xf]
    %v95 = vld [vmem:[#allocation6 + $0x40] sm:$0xf]
    %v96 = vld [vmem:[#allocation6 + $0x44] sm:$0xf]
    %v97 = vld [vmem:[#allocation6 + $0x48] sm:$0xf]
    %v98 = vld [vmem:[#allocation6 + $0x4c] sm:$0xf]
    %v99 = vld [vmem:[#allocation6 + $0x50] sm:$0xf]
    %v100 = vld [vmem:[#allocation6 + $0x54] sm:$0xf]
    %v101 = vld [vmem:[#allocation6 + $0x58] sm:$0xf]
    %v102 = vld [vmem:[#allocation6 + $0x5c] sm:$0xf]
    %v103 = vld [vmem:[#allocation6 + $0x60] sm:$0xf]
    %v104 = vld [vmem:[#allocation6 + $0x64] sm:$0xf]
    %v105 = vld [vmem:[#allocation6 + $0x68] sm:$0xf]
    %v106 = vld [vmem:[#allocation6 + $0x6c] sm:$0xf]
    %v107 = vld [vmem:[#allocation6 + $0x70] sm:$0xf]
    %v108 = vld [vmem:[#allocation6 + $0x74] sm:$0xf]
    %v109 = vld [vmem:[#allocation6 + $0x78] sm:$0xf]
    %v110 = vld [vmem:[#allocation6 + $0x7c] sm:$0xf]
    %v111 = vld [vmem:[#allocation6 + $0x80] sm:$0xf]
    %v112 = vld [vmem:[#allocation6 + $0x84] sm:$0xf]
    %v113 = vld [vmem:[#allocation6 + $0x88] sm:$0xf]
    %v114 = vld [vmem:[#allocation6 + $0x8c] sm:$0xf]
    %v115 = vld [vmem:[#allocation6 + $0x90] sm:$0xf]
    %v116 = vld [vmem:[#allocation6 + $0x94] sm:$0xf]
    %v117 = vld [vmem:[#allocation6 + $0x98] sm:$0xf]
    %v118 = vld [vmem:[#allocation6 + $0x9c] sm:$0xf]
    %v119 = vld [vmem:[#allocation6 + $0xa0] sm:$0xf]
    %v120 = vld [vmem:[#allocation6 + $0xa4] sm:$0xf]
    %v121 = vld [vmem:[#allocation6 + $0xa8] sm:$0xf]
    %v122 = vld [vmem:[#allocation6 + $0xac] sm:$0xf]
    %v123 = vld [vmem:[#allocation6 + $0xb0] sm:$0xf]
    %v124 = vld [vmem:[#allocation6 + $0xb4] sm:$0xf]
    %v125 = vld [vmem:[#allocation6 + $0xb8] sm:$0xf]
    %v126 = vld [vmem:[#allocation6 + $0xbc] sm:$0xf]
    %v127 = vld [vmem:[#allocation6 + $0xc0] sm:$0xf]
    %v128 = vld [vmem:[#allocation6 + $0xc4] sm:$0xf]
    %v129 = vld [vmem:[#allocation6 + $0xc8] sm:$0xf]
    %v130 = vld [vmem:[#allocation6 + $0xcc] sm:$0xf]
    %v131 = vld [vmem:[#allocation6 + $0xd0] sm:$0xf]
    %v132 = vld [vmem:[#allocation6 + $0xd4] sm:$0xf]
    %v133 = vld [vmem:[#allocation6 + $0xd8] sm:$0xf]
    %v134 = vld [vmem:[#allocation6 + $0xdc] sm:$0xf]
    %v135 = vld [vmem:[#allocation6 + $0xe0] sm:$0xf]
    %v136 = vld [vmem:[#allocation6 + $0xe4] sm:$0xf]
    %v137 = vld [vmem:[#allocation6 + $0xe8] sm:$0xf]
    %v138 = vld [vmem:[#allocation6 + $0xec] sm:$0xf]
    %v139 = vld [vmem:[#allocation6 + $0xf0] sm:$0xf]
    %v140 = vld [vmem:[#allocation6 + $0xf4] sm:$0xf]
    %v141 = vld [vmem:[#allocation6 + $0xf8] sm:$0xf]
    %v142 = vld [vmem:[#allocation6 + $0xfc] sm:$0xf]
    %v143 = vld [vmem:[#allocation6 + $0x100] sm:$0xf]
    %v144 = vld [vmem:[#allocation6 + $0x104] sm:$0xf]
    %v145 = vld [vmem:[#allocation6 + $0x108] sm:$0xf]
    %v146 = vld [vmem:[#allocation6 + $0x10c] sm:$0xf]
    %v147 = vld [vmem:[#allocation6 + $0x110] sm:$0xf]
    %v148 = vld [vmem:[#allocation6 + $0x114] sm:$0xf]
    %v149 = vld [vmem:[#allocation6 + $0x118] sm:$0xf]
    %v150 = vld [vmem:[#allocation6 + $0x11c] sm:$0xf]
    %v151 = vld [vmem:[#allocation6 + $0x120] sm:$0xf]
    %v152 = vld [vmem:[#allocation6 + $0x124] sm:$0xf]
    %v153 = vld [vmem:[#allocation6 + $0x128] sm:$0xf]
    %v154 = vld [vmem:[#allocation6 + $0x12c] sm:$0xf]
    %v155 = vld [vmem:[#allocation6 + $0x130] sm:$0xf]
    %v156 = vld [vmem:[#allocation6 + $0x134] sm:$0xf]
    %v157 = vld [vmem:[#allocation6 + $0x138] sm:$0xf]
    %v158 = vld [vmem:[#allocation6 + $0x13c] sm:$0xf]
    %v159 = vld [vmem:[#allocation6 + $0x140] sm:$0xf]
    %v160 = vld [vmem:[#allocation6 + $0x144] sm:$0xf]
    %v161 = vld [vmem:[#allocation6 + $0x148] sm:$0xf]
    %v162 = vld [vmem:[#allocation6 + $0x14c] sm:$0xf]
    %v163 = vld [vmem:[#allocation6 + $0x150] sm:$0xf]
    %v164 = vld [vmem:[#allocation6 + $0x154] sm:$0xf]
    %v165 = vld [vmem:[#allocation6 + $0x158] sm:$0xf]
    %v166 = vld [vmem:[#allocation6 + $0x15c] sm:$0xf]
    %v167 = vld [vmem:[#allocation6 + $0x160] sm:$0xf]
    %v168 = vld [vmem:[#allocation6 + $0x164] sm:$0xf]
    %v169 = vld [vmem:[#allocation6 + $0x168] sm:$0xf]
    %v170 = vld [vmem:[#allocation6 + $0x16c] sm:$0xf]
    %v171 = vld [vmem:[#allocation6 + $0x170] sm:$0xf]
    %v172 = vld [vmem:[#allocation6 + $0x174] sm:$0xf]
    %v173 = vld [vmem:[#allocation6 + $0x178] sm:$0xf]
    %v174 = vld [vmem:[#allocation6 + $0x17c] sm:$0xf]
    %v175 = vld [vmem:[#allocation6 + $0x180] sm:$0xf]
    %v176 = vld [vmem:[#allocation6 + $0x184] sm:$0xf]
    %v177 = vld [vmem:[#allocation6 + $0x188] sm:$0xf]
    %v178 = vld [vmem:[#allocation6 + $0x18c] sm:$0xf]
    %v179 = vld [vmem:[#allocation6 + $0x190] sm:$0xf]
    %v180 = vld [vmem:[#allocation6 + $0x194] sm:$0xf]
    %v181 = vld [vmem:[#allocation6 + $0x198] sm:$0xf]
    %v182 = vld [vmem:[#allocation6 + $0x19c] sm:$0xf]
    %v183 = vld [vmem:[#allocation6 + $0x1a0] sm:$0xf]
    %v184 = vld [vmem:[#allocation6 + $0x1a4] sm:$0xf]
    %v185 = vld [vmem:[#allocation6 + $0x1a8] sm:$0xf]
    %v186 = vld [vmem:[#allocation6 + $0x1ac] sm:$0xf]
    %v187 = vld [vmem:[#allocation6 + $0x1b0] sm:$0xf]
    %v188 = vld [vmem:[#allocation6 + $0x1b4] sm:$0xf]
    %v189 = vld [vmem:[#allocation6 + $0x1b8] sm:$0xf]
    %v190 = vld [vmem:[#allocation6 + $0x1bc] sm:$0xf]
    %v191 = vld [vmem:[#allocation6 + $0x1c0] sm:$0xf]
    %v192 = vld [vmem:[#allocation6 + $0x1c4] sm:$0xf]
    %v193 = vld [vmem:[#allocation6 + $0x1c8] sm:$0xf]
    %v194 = vld [vmem:[#allocation6 + $0x1cc] sm:$0xf]
    %v195 = vld [vmem:[#allocation6 + $0x1d0] sm:$0xf]
    %v196 = vld [vmem:[#allocation6 + $0x1d4] sm:$0xf]
    %v197 = vld [vmem:[#allocation6 + $0x1d8] sm:$0xf]
    %v198 = vld [vmem:[#allocation6 + $0x1dc] sm:$0xf]
    %v199 = vld [vmem:[#allocation6 + $0x1e0] sm:$0xf]
    %v200 = vld [vmem:[#allocation6 + $0x1e4] sm:$0xf]
    %v201 = vld [vmem:[#allocation6 + $0x1e8] sm:$0xf]
    %v202 = vld [vmem:[#allocation6 + $0x1ec] sm:$0xf]
    %v203 = vld [vmem:[#allocation6 + $0x1f0] sm:$0xf]
    %v204 = vld [vmem:[#allocation6 + $0x1f4] sm:$0xf]
    %v205 = vld [vmem:[#allocation6 + $0x1f8] sm:$0xf]
    %v206 = vld [vmem:[#allocation6 + $0x1fc] sm:$0xf]
    %v215 = vunpack.c.l.b16 %v71
    %v216 = vunpack.c.h.b16 %v71
    %v217 = vunpack.c.l.b16 %v72
    %v218 = vunpack.c.h.b16 %v72
    %v219 = vunpack.c.l.b16 %v73
    %v220 = vunpack.c.h.b16 %v73
    %v221 = vunpack.c.l.b16 %v74
    %v222 = vunpack.c.h.b16 %v74
    %v223 = vunpack.c.l.b16 %v75
    %v224 = vunpack.c.h.b16 %v75
    %v225 = vunpack.c.l.b16 %v76
    %v226 = vunpack.c.h.b16 %v76
    %v227 = vunpack.c.l.b16 %v77
    %v228 = vunpack.c.h.b16 %v77
    %v229 = vunpack.c.l.b16 %v78
    %v230 = vunpack.c.h.b16 %v78
    %v231 = vpack.c.b16 %v223, %v215
    %v232 = vpack.c.b16 %v224, %v216
    %v233 = vpack.c.b16 %v225, %v217
    %v234 = vpack.c.b16 %v226, %v218
    %v235 = vpack.c.b16 %v227, %v219
    %v236 = vpack.c.b16 %v228, %v220
    %v237 = vpack.c.b16 %v229, %v221
    %v238 = vpack.c.b16 %v230, %v222
    %v375 = vunpack.c.l.b16 %v79
    %v376 = vunpack.c.l.b16 %v80
    %v377 = vunpack.c.l.b16 %v81
    %v378 = vunpack.c.l.b16 %v82
    %v379 = vunpack.c.l.b16 %v83
    %v380 = vunpack.c.l.b16 %v84
    %v381 = vunpack.c.l.b16 %v85
    %v382 = vunpack.c.l.b16 %v86
    %v383 = vunpack.c.l.b16 %v87
    %v384 = vunpack.c.l.b16 %v88
    %v385 = vunpack.c.l.b16 %v89
    %v386 = vunpack.c.l.b16 %v90
    %v387 = vunpack.c.l.b16 %v91
    %v388 = vunpack.c.l.b16 %v92
    %v389 = vunpack.c.l.b16 %v93
    %v390 = vunpack.c.l.b16 %v94
    %v391 = vunpack.c.l.b16 %v95
    %v392 = vunpack.c.l.b16 %v96
    %v393 = vunpack.c.l.b16 %v97
    %v394 = vunpack.c.l.b16 %v98
    %v395 = vunpack.c.l.b16 %v99
    %v396 = vunpack.c.l.b16 %v100
    %v397 = vunpack.c.l.b16 %v101
    %v398 = vunpack.c.l.b16 %v102
    %v399 = vunpack.c.l.b16 %v103
    %v400 = vunpack.c.l.b16 %v104
    %v401 = vunpack.c.l.b16 %v105
    %v402 = vunpack.c.l.b16 %v106
    %v403 = vunpack.c.l.b16 %v107
    %v404 = vunpack.c.l.b16 %v108
    %v405 = vunpack.c.l.b16 %v109
    %v406 = vunpack.c.l.b16 %v110
    %v407 = vunpack.c.l.b16 %v111
    %v408 = vunpack.c.l.b16 %v112
    %v409 = vunpack.c.l.b16 %v113
    %v410 = vunpack.c.l.b16 %v114
    %v411 = vunpack.c.l.b16 %v115
    %v412 = vunpack.c.l.b16 %v116
    %v413 = vunpack.c.l.b16 %v117
    %v414 = vunpack.c.l.b16 %v118
    %v415 = vunpack.c.l.b16 %v119
    %v416 = vunpack.c.l.b16 %v120
    %v417 = vunpack.c.l.b16 %v121
    %v418 = vunpack.c.l.b16 %v122
    %v419 = vunpack.c.l.b16 %v123
    %v420 = vunpack.c.l.b16 %v124
    %v421 = vunpack.c.l.b16 %v125
    %v422 = vunpack.c.l.b16 %v126
    %v423 = vunpack.c.l.b16 %v127
    %v424 = vunpack.c.l.b16 %v128
    %v425 = vunpack.c.l.b16 %v129
    %v426 = vunpack.c.l.b16 %v130
    %v427 = vunpack.c.l.b16 %v131
    %v428 = vunpack.c.l.b16 %v132
    %v429 = vunpack.c.l.b16 %v133
    %v430 = vunpack.c.l.b16 %v134
    %v431 = vunpack.c.l.b16 %v135
    %v432 = vunpack.c.l.b16 %v136
    %v433 = vunpack.c.l.b16 %v137
    %v434 = vunpack.c.l.b16 %v138
    %v435 = vunpack.c.l.b16 %v139
    %v436 = vunpack.c.l.b16 %v140
    %v437 = vunpack.c.l.b16 %v141
    %v438 = vunpack.c.l.b16 %v142
    %v439 = vunpack.c.l.b16 %v143
    %v440 = vunpack.c.l.b16 %v144
    %v441 = vunpack.c.l.b16 %v145
    %v442 = vunpack.c.l.b16 %v146
    %v443 = vunpack.c.l.b16 %v147
    %v444 = vunpack.c.l.b16 %v148
    %v445 = vunpack.c.l.b16 %v149
    %v446 = vunpack.c.l.b16 %v150
    %v447 = vunpack.c.l.b16 %v151
    %v448 = vunpack.c.l.b16 %v152
    %v449 = vunpack.c.l.b16 %v153
    %v450 = vunpack.c.l.b16 %v154
    %v451 = vunpack.c.l.b16 %v155
    %v452 = vunpack.c.l.b16 %v156
    %v453 = vunpack.c.l.b16 %v157
    %v454 = vunpack.c.l.b16 %v158
    %v455 = vunpack.c.l.b16 %v159
    %v456 = vunpack.c.l.b16 %v160
    %v457 = vunpack.c.l.b16 %v161
    %v458 = vunpack.c.l.b16 %v162
    %v459 = vunpack.c.l.b16 %v163
    %v460 = vunpack.c.l.b16 %v164
    %v461 = vunpack.c.l.b16 %v165
    %v462 = vunpack.c.l.b16 %v166
    %v463 = vunpack.c.l.b16 %v167
    %v464 = vunpack.c.l.b16 %v168
    %v465 = vunpack.c.l.b16 %v169
    %v466 = vunpack.c.l.b16 %v170
    %v467 = vunpack.c.l.b16 %v171
    %v468 = vunpack.c.l.b16 %v172
    %v469 = vunpack.c.l.b16 %v173
    %v470 = vunpack.c.l.b16 %v174
    %v471 = vunpack.c.l.b16 %v175
    %v472 = vunpack.c.l.b16 %v176
    %v473 = vunpack.c.l.b16 %v177
    %v474 = vunpack.c.l.b16 %v178
    %v475 = vunpack.c.l.b16 %v179
    %v476 = vunpack.c.l.b16 %v180
    %v477 = vunpack.c.l.b16 %v181
    %v478 = vunpack.c.l.b16 %v182
    %v479 = vunpack.c.l.b16 %v183
    %v480 = vunpack.c.l.b16 %v184
    %v481 = vunpack.c.l.b16 %v185
    %v482 = vunpack.c.l.b16 %v186
    %v483 = vunpack.c.l.b16 %v187
    %v484 = vunpack.c.l.b16 %v188
    %v485 = vunpack.c.l.b16 %v189
    %v486 = vunpack.c.l.b16 %v190
    %v487 = vunpack.c.l.b16 %v191
    %v488 = vunpack.c.l.b16 %v192
    %v489 = vunpack.c.l.b16 %v193
    %v490 = vunpack.c.l.b16 %v194
    %v491 = vunpack.c.l.b16 %v195
    %v492 = vunpack.c.l.b16 %v196
    %v493 = vunpack.c.l.b16 %v197
    %v494 = vunpack.c.l.b16 %v198
    %v495 = vunpack.c.l.b16 %v199
    %v496 = vunpack.c.l.b16 %v200
    %v497 = vunpack.c.l.b16 %v201
    %v498 = vunpack.c.l.b16 %v202
    %v499 = vunpack.c.l.b16 %v203
    %v500 = vunpack.c.l.b16 %v204
    %v501 = vunpack.c.l.b16 %v205
    %v502 = vunpack.c.l.b16 %v206
    %v503 = vpack.c.b16 %v376, %v375
    %v504 = vpack.c.b16 %v378, %v377
    %v505 = vpack.c.b16 %v380, %v379
    %v506 = vpack.c.b16 %v382, %v381
    %v507 = vpack.c.b16 %v384, %v383
    %v508 = vpack.c.b16 %v386, %v385
    %v509 = vpack.c.b16 %v388, %v387
    %v510 = vpack.c.b16 %v390, %v389
    %v511 = vpack.c.b16 %v392, %v391
    %v512 = vpack.c.b16 %v394, %v393
    %v513 = vpack.c.b16 %v396, %v395
    %v514 = vpack.c.b16 %v398, %v397
    %v515 = vpack.c.b16 %v400, %v399
    %v516 = vpack.c.b16 %v402, %v401
    %v517 = vpack.c.b16 %v404, %v403
    %v518 = vpack.c.b16 %v406, %v405
    %v519 = vpack.c.b16 %v408, %v407
    %v520 = vpack.c.b16 %v410, %v409
    %v521 = vpack.c.b16 %v412, %v411
    %v522 = vpack.c.b16 %v414, %v413
    %v523 = vpack.c.b16 %v416, %v415
    %v524 = vpack.c.b16 %v418, %v417
    %v525 = vpack.c.b16 %v420, %v419
    %v526 = vpack.c.b16 %v422, %v421
    %v527 = vpack.c.b16 %v424, %v423
    %v528 = vpack.c.b16 %v426, %v425
    %v529 = vpack.c.b16 %v428, %v427
    %v530 = vpack.c.b16 %v430, %v429
    %v531 = vpack.c.b16 %v432, %v431
    %v532 = vpack.c.b16 %v434, %v433
    %v533 = vpack.c.b16 %v436, %v435
    %v534 = vpack.c.b16 %v438, %v437
    %v535 = vpack.c.b16 %v440, %v439
    %v536 = vpack.c.b16 %v442, %v441
    %v537 = vpack.c.b16 %v444, %v443
    %v538 = vpack.c.b16 %v446, %v445
    %v539 = vpack.c.b16 %v448, %v447
    %v540 = vpack.c.b16 %v450, %v449
    %v541 = vpack.c.b16 %v452, %v451
    %v542 = vpack.c.b16 %v454, %v453
    %v543 = vpack.c.b16 %v456, %v455
    %v544 = vpack.c.b16 %v458, %v457
    %v545 = vpack.c.b16 %v460, %v459
    %v546 = vpack.c.b16 %v462, %v461
    %v547 = vpack.c.b16 %v464, %v463
    %v548 = vpack.c.b16 %v466, %v465
    %v549 = vpack.c.b16 %v468, %v467
    %v550 = vpack.c.b16 %v470, %v469
    %v551 = vpack.c.b16 %v472, %v471
    %v552 = vpack.c.b16 %v474, %v473
    %v553 = vpack.c.b16 %v476, %v475
    %v554 = vpack.c.b16 %v478, %v477
    %v555 = vpack.c.b16 %v480, %v479
    %v556 = vpack.c.b16 %v482, %v481
    %v557 = vpack.c.b16 %v484, %v483
    %v558 = vpack.c.b16 %v486, %v485
    %v559 = vpack.c.b16 %v488, %v487
    %v560 = vpack.c.b16 %v490, %v489
    %v561 = vpack.c.b16 %v492, %v491
    %v562 = vpack.c.b16 %v494, %v493
    %v563 = vpack.c.b16 %v496, %v495
    %v564 = vpack.c.b16 %v498, %v497
    %v565 = vpack.c.b16 %v500, %v499
    %v566 = vpack.c.b16 %v502, %v501
    %631 = vmatprep.subr.bf16.mxu0 0
    %632 = vmatpush1.bf16.msra.mxu0 %v503
    %633 = vmatprep.subr.bf16.mxu0 0
    %634 = vmatpush1.bf16.msra.mxu0 %v504
    %635 = vmatprep.subr.bf16.mxu0 0
    %636 = vmatpush1.bf16.msra.mxu0 %v505
    %637 = vmatprep.subr.bf16.mxu0 0
    %638 = vmatpush1.bf16.msra.mxu0 %v506
    %639 = vmatprep.subr.bf16.mxu0 0
    %640 = vmatpush1.bf16.msra.mxu0 %v507
    %641 = vmatprep.subr.bf16.mxu0 0
    %642 = vmatpush1.bf16.msra.mxu0 %v508
    %643 = vmatprep.subr.bf16.mxu0 0
    %644 = vmatpush1.bf16.msra.mxu0 %v509
    %645 = vmatprep.subr.bf16.mxu0 0
    %646 = vmatpush1.bf16.msra.mxu0 %v510
    %647 = vmatprep.subr.bf16.mxu0 0
    %648 = vmatpush1.bf16.msra.mxu0 %v511
    %649 = vmatprep.subr.bf16.mxu0 0
    %650 = vmatpush1.bf16.msra.mxu0 %v512
    %651 = vmatprep.subr.bf16.mxu0 0
    %652 = vmatpush1.bf16.msra.mxu0 %v513
    %653 = vmatprep.subr.bf16.mxu0 0
    %654 = vmatpush1.bf16.msra.mxu0 %v514
    %655 = vmatprep.subr.bf16.mxu0 0
    %656 = vmatpush1.bf16.msra.mxu0 %v515
    %657 = vmatprep.subr.bf16.mxu0 0
    %658 = vmatpush1.bf16.msra.mxu0 %v516
    %659 = vmatprep.subr.bf16.mxu0 0
    %660 = vmatpush1.bf16.msra.mxu0 %v517
    %661 = vmatprep.subr.bf16.mxu0 0
    %662 = vmatpush1.bf16.msra.mxu0 %v518
    %663 = vmatprep.mubr.bf16.mxu0 %v232
    %664 = vmatmul.mubr.bf16.gmra.mrb[0].mxu0 %v231
    %v665 = vpop.f32.mrb[0].mxu0
    %v666 = vadd.f32 0.0, %v665
    %v667 = vpop.f32.mrb[0].mxu0
    %v668 = vpop.f32.mrb[0].mxu0
    %v669 = vadd.f32 0.0, %v668
    %v670 = vpop.f32.mrb[0].mxu0
    %671 = vdwg.mxu0
    %672 = vmatprep.subr.bf16.mxu0 0
    %673 = vmatpush1.bf16.msra.mxu0 %v519
    %674 = vmatprep.subr.bf16.mxu0 0
    %675 = vmatpush1.bf16.msra.mxu0 %v520
    %676 = vmatprep.subr.bf16.mxu0 0
    %677 = vmatpush1.bf16.msra.mxu0 %v521
    %678 = vmatprep.subr.bf16.mxu0 0
    %679 = vmatpush1.bf16.msra.mxu0 %v522
    %680 = vmatprep.subr.bf16.mxu0 0
    %681 = vmatpush1.bf16.msra.mxu0 %v523
    %682 = vmatprep.subr.bf16.mxu0 0
    %683 = vmatpush1.bf16.msra.mxu0 %v524
    %684 = vmatprep.subr.bf16.mxu0 0
    %685 = vmatpush1.bf16.msra.mxu0 %v525
    %686 = vmatprep.subr.bf16.mxu0 0
    %687 = vmatpush1.bf16.msra.mxu0 %v526
    %688 = vmatprep.subr.bf16.mxu0 0
    %689 = vmatpush1.bf16.msra.mxu0 %v527
    %690 = vmatprep.subr.bf16.mxu0 0
    %691 = vmatpush1.bf16.msra.mxu0 %v528
    %692 = vmatprep.subr.bf16.mxu0 0
    %693 = vmatpush1.bf16.msra.mxu0 %v529
    %694 = vmatprep.subr.bf16.mxu0 0
    %695 = vmatpush1.bf16.msra.mxu0 %v530
    %696 = vmatprep.subr.bf16.mxu0 0
    %697 = vmatpush1.bf16.msra.mxu0 %v531
    %698 = vmatprep.subr.bf16.mxu0 0
    %699 = vmatpush1.bf16.msra.mxu0 %v532
    %700 = vmatprep.subr.bf16.mxu0 0
    %701 = vmatpush1.bf16.msra.mxu0 %v533
    %702 = vmatprep.subr.bf16.mxu0 0
    %703 = vmatpush1.bf16.msra.mxu0 %v534
    %704 = vmatprep.mubr.bf16.mxu0 %v234
    %705 = vmatmul.mubr.bf16.gmra.mrb[0].mxu0 %v233
    %v706 = vpop.f32.mrb[0].mxu0
    %v707 = vadd.f32 %v666, %v706
    %v708 = vpop.f32.mrb[0].mxu0
    %v709 = vpop.f32.mrb[0].mxu0
    %v710 = vadd.f32 %v669, %v709
    %v711 = vpop.f32.mrb[0].mxu0
    %712 = vdwg.mxu0
    %713 = vmatprep.subr.bf16.mxu0 0
    %714 = vmatpush1.bf16.msra.mxu0 %v535
    %715 = vmatprep.subr.bf16.mxu0 0
    %716 = vmatpush1.bf16.msra.mxu0 %v536
    %717 = vmatprep.subr.bf16.mxu0 0
    %718 = vmatpush1.bf16.msra.mxu0 %v537
    %719 = vmatprep.subr.bf16.mxu0 0
    %720 = vmatpush1.bf16.msra.mxu0 %v538
    %721 = vmatprep.subr.bf16.mxu0 0
    %722 = vmatpush1.bf16.msra.mxu0 %v539
    %723 = vmatprep.subr.bf16.mxu0 0
    %724 = vmatpush1.bf16.msra.mxu0 %v540
    %725 = vmatprep.subr.bf16.mxu0 0
    %726 = vmatpush1.bf16.msra.mxu0 %v541
    %727 = vmatprep.subr.bf16.mxu0 0
    %728 = vmatpush1.bf16.msra.mxu0 %v542
    %729 = vmatprep.subr.bf16.mxu0 0
    %730 = vmatpush1.bf16.msra.mxu0 %v543
    %731 = vmatprep.subr.bf16.mxu0 0
    %732 = vmatpush1.bf16.msra.mxu0 %v544
    %733 = vmatprep.subr.bf16.mxu0 0
    %734 = vmatpush1.bf16.msra.mxu0 %v545
    %735 = vmatprep.subr.bf16.mxu0 0
    %736 = vmatpush1.bf16.msra.mxu0 %v546
    %737 = vmatprep.subr.bf16.mxu0 0
    %738 = vmatpush1.bf16.msra.mxu0 %v547
    %739 = vmatprep.subr.bf16.mxu0 0
    %740 = vmatpush1.bf16.msra.mxu0 %v548
    %741 = vmatprep.subr.bf16.mxu0 0
    %742 = vmatpush1.bf16.msra.mxu0 %v549
    %743 = vmatprep.subr.bf16.mxu0 0
    %744 = vmatpush1.bf16.msra.mxu0 %v550
    %745 = vmatprep.mubr.bf16.mxu0 %v236
    %746 = vmatmul.mubr.bf16.gmra.mrb[0].mxu0 %v235
    %v747 = vpop.f32.mrb[0].mxu0
    %v748 = vadd.f32 %v707, %v747
    %v749 = vpop.f32.mrb[0].mxu0
    %v750 = vpop.f32.mrb[0].mxu0
    %v751 = vadd.f32 %v710, %v750
    %v752 = vpop.f32.mrb[0].mxu0
    %753 = vdwg.mxu0
    %754 = vmatprep.subr.bf16.mxu0 0
    %755 = vmatpush1.bf16.msra.mxu0 %v551
    %756 = vmatprep.subr.bf16.mxu0 0
    %757 = vmatpush1.bf16.msra.mxu0 %v552
    %758 = vmatprep.subr.bf16.mxu0 0
    %759 = vmatpush1.bf16.msra.mxu0 %v553
    %760 = vmatprep.subr.bf16.mxu0 0
    %761 = vmatpush1.bf16.msra.mxu0 %v554
    %762 = vmatprep.subr.bf16.mxu0 0
    %763 = vmatpush1.bf16.msra.mxu0 %v555
    %764 = vmatprep.subr.bf16.mxu0 0
    %765 = vmatpush1.bf16.msra.mxu0 %v556
    %766 = vmatprep.subr.bf16.mxu0 0
    %767 = vmatpush1.bf16.msra.mxu0 %v557
    %768 = vmatprep.subr.bf16.mxu0 0
    %769 = vmatpush1.bf16.msra.mxu0 %v558
    %770 = vmatprep.subr.bf16.mxu0 0
    %771 = vmatpush1.bf16.msra.mxu0 %v559
    %772 = vmatprep.subr.bf16.mxu0 0
    %773 = vmatpush1.bf16.msra.mxu0 %v560
    %774 = vmatprep.subr.bf16.mxu0 0
    %775 = vmatpush1.bf16.msra.mxu0 %v561
    %776 = vmatprep.subr.bf16.mxu0 0
    %777 = vmatpush1.bf16.msra.mxu0 %v562
    %778 = vmatprep.subr.bf16.mxu0 0
    %779 = vmatpush1.bf16.msra.mxu0 %v563
    %780 = vmatprep.subr.bf16.mxu0 0
    %781 = vmatpush1.bf16.msra.mxu0 %v564
    %782 = vmatprep.subr.bf16.mxu0 0
    %783 = vmatpush1.bf16.msra.mxu0 %v565
    %784 = vmatprep.subr.bf16.mxu0 0
    %785 = vmatpush1.bf16.msra.mxu0 %v566
    %786 = vmatprep.mubr.bf16.mxu0 %v238
    %787 = vmatmul.mubr.bf16.gmra.mrb[0].mxu0 %v237
    %v788 = vpop.f32.mrb[0].mxu0
    %v789 = vadd.f32 %v748, %v788
    %v790 = vpop.f32.mrb[0].mxu0
    %v791 = vpop.f32.mrb[0].mxu0
    %v792 = vadd.f32 %v751, %v791
    %v793 = vpop.f32.mrb[0].mxu0
    %794 = vdwg.mxu0
    %v795 = vadd.f32 %v69, %v789
    %v796 = vadd.f32 %v70, %v792
    %797 = vst [vmem:[#allocation2] sm:$0xff] %v795
    %798 = vst [vmem:[#allocation2 + $0x8] sm:$0xff] %v796
    // Predicated region
    $region38: #{tpu_custom_call.1} parent=1 // pred_check
      %p799 = pneg %p63
    $region39: #{tpu_custom_call.1} parent=1 // pred_check_branch
      %801 = sbr.rel (%p799) target = $region41
    $region40: #{tpu_custom_call.1} parent=1 // pred_region
      %v802 = vld [vmem:[#allocation2] sm:$0xff]
      %v803 = vld [vmem:[#allocation2 + $0x8] sm:$0xff]
      %v804 = vld [vmem:[%s2] sm:$0x1]
      %v806 = vlaneseq
      %v807 = vshrl.u32 %v806, 7
      %v808 = vsub.s32 0, %v807
      %v809 = vrot.slane %v804, %v808
      %v811 = vadd.f32 %v802, %v809
      %v812 = vadd.f32 %v803, %v809
      %v813 = vmax.f32 %v811, 0.0
      %v814 = vmax.f32 %v812, 0.0
      %v815 = vpack.c.bf16 %v814, %v813
      %v816 = vld [vmem:[#allocation8] sm:$0xf]
      %v817 = vld [vmem:[#allocation8 + $0x4] sm:$0xf]
      %v818 = vld [vmem:[#allocation8 + $0x8] sm:$0xf]
      %v819 = vld [vmem:[#allocation8 + $0xc] sm:$0xf]
      %v820 = vld [vmem:[#allocation8 + $0x10] sm:$0xf]
      %v821 = vld [vmem:[#allocation8 + $0x14] sm:$0xf]
      %v822 = vld [vmem:[#allocation8 + $0x18] sm:$0xf]
      %v823 = vld [vmem:[#allocation8 + $0x1c] sm:$0xf]
      %v824 = vld [vmem:[#allocation8 + $0x20] sm:$0xf]
      %v825 = vld [vmem:[#allocation8 + $0x24] sm:$0xf]
      %v826 = vld [vmem:[#allocation8 + $0x28] sm:$0xf]
      %v827 = vld [vmem:[#allocation8 + $0x2c] sm:$0xf]
      %v828 = vld [vmem:[#allocation8 + $0x30] sm:$0xf]
      %v829 = vld [vmem:[#allocation8 + $0x34] sm:$0xf]
      %v830 = vld [vmem:[#allocation8 + $0x38] sm:$0xf]
      %v831 = vld [vmem:[#allocation8 + $0x3c] sm:$0xf]
      %v832 = vld [vmem:[%s4] sm:$0x1]
      %v834 = vlaneseq
      %v835 = vshrl.u32 %v834, 7
      %v836 = vsub.s32 0, %v835
      %v837 = vrot.slane %v832, %v836
      %v855 = vunpack.c.l.b16 %v816
      %v856 = vunpack.c.l.b16 %v817
      %v857 = vunpack.c.l.b16 %v818
      %v858 = vunpack.c.l.b16 %v819
      %v859 = vunpack.c.l.b16 %v820
      %v860 = vunpack.c.l.b16 %v821
      %v861 = vunpack.c.l.b16 %v822
      %v862 = vunpack.c.l.b16 %v823
      %v863 = vunpack.c.l.b16 %v824
      %v864 = vunpack.c.l.b16 %v825
      %v865 = vunpack.c.l.b16 %v826
      %v866 = vunpack.c.l.b16 %v827
      %v867 = vunpack.c.l.b16 %v828
      %v868 = vunpack.c.l.b16 %v829
      %v869 = vunpack.c.l.b16 %v830
      %v870 = vunpack.c.l.b16 %v831
      %v871 = vpack.c.b16 %v856, %v855
      %v872 = vpack.c.b16 %v858, %v857
      %v873 = vpack.c.b16 %v860, %v859
      %v874 = vpack.c.b16 %v862, %v861
      %v875 = vpack.c.b16 %v864, %v863
      %v876 = vpack.c.b16 %v866, %v865
      %v877 = vpack.c.b16 %v868, %v867
      %v878 = vpack.c.b16 %v870, %v869
      %887 = vmatprep.subr.bf16.mxu0 0
      %888 = vmatpush1.bf16.msra.mxu0 %v871
      %889 = vmatprep.subr.bf16.mxu0 0
      %890 = vmatpush1.bf16.msra.mxu0 %v872
      %891 = vmatprep.subr.bf16.mxu0 0
      %892 = vmatpush1.bf16.msra.mxu0 %v873
      %893 = vmatprep.subr.bf16.mxu0 0
      %894 = vmatpush1.bf16.msra.mxu0 %v874
      %895 = vmatprep.subr.bf16.mxu0 0
      %896 = vmatpush1.bf16.msra.mxu0 %v875
      %897 = vmatprep.subr.bf16.mxu0 0
      %898 = vmatpush1.bf16.msra.mxu0 %v876
      %899 = vmatprep.subr.bf16.mxu0 0
      %900 = vmatpush1.bf16.msra.mxu0 %v877
      %901 = vmatprep.subr.bf16.mxu0 0
      %902 = vmatpush1.bf16.msra.mxu0 %v878
      %903 = vmatprep.subr.bf16.mxu0 0
      %904 = vmatpush1.bf16.msra.mxu0 0
      %905 = vmatprep.subr.bf16.mxu0 0
      %906 = vmatpush1.bf16.msra.mxu0 0
      %907 = vmatprep.subr.bf16.mxu0 0
      %908 = vmatpush1.bf16.msra.mxu0 0
      %909 = vmatprep.subr.bf16.mxu0 0
      %910 = vmatpush1.bf16.msra.mxu0 0
      %911 = vmatprep.subr.bf16.mxu0 0
      %912 = vmatpush1.bf16.msra.mxu0 0
      %913 = vmatprep.subr.bf16.mxu0 0
      %914 = vmatpush1.bf16.msra.mxu0 0
      %915 = vmatprep.subr.bf16.mxu0 0
      %916 = vmatpush1.bf16.msra.mxu0 0
      %917 = vmatprep.subr.bf16.mxu0 0
      %918 = vmatpush1.bf16.msra.mxu0 0
      %919 = vmatprep.mubr.bf16.mxu0 0
      %920 = vmatmul.mubr.bf16.gmra.mrb[0].mxu0 %v815
      %v921 = vpop.f32.mrb[0].mxu0
      %v922 = vadd.f32 %v837, %v921
      %v923 = vpop.f32.mrb[0].mxu0
      %v924 = vpop.f32.mrb[0].mxu0
      %v925 = vadd.f32 %v837, %v924
      %v926 = vpop.f32.mrb[0].mxu0
      %927 = vdwg.mxu0
      %v928 = vmax.f32 %v922, 0.0
      %v929 = vmax.f32 %v925, 0.0
      %930 = vst [vmem:[#allocation9] sm:$0xff] %v928
      %931 = vst [vmem:[#allocation9 + $0x8] sm:$0xff] %v929
    $region41: #{tpu_custom_call.1} parent=1 // pred_fallthru
      _
    // Predicated region
    $region42: #{tpu_custom_call.1} parent=1 // pred_check
      _
    $region43: #{tpu_custom_call.1} parent=1 // pred_check_branch
      %933 = sbr.rel (0) target = $region45
    $region44: #{tpu_custom_call.1} parent=1 // pred_region
      %s935 = ssub.s32 256, 256
      %936 = vsyncadd [#allocation5], %s935
      %s937 = sshll.u32 [#allocation9], 4
      %s938 = int_to_ptr.vmem [resolvable:$true] %s937
      %943 = dma.vmem_to_hbm [thread:$0]  %s938, 256, %s5, [#allocation5], 128, 128, 8
    $region45: #{tpu_custom_call.1} parent=1 // pred_fallthru
      _
    // Predicated region
    $region46: #{tpu_custom_call.1} parent=1 // pred_check
      _
    $region47: #{tpu_custom_call.1} parent=1 // pred_check_branch
      %945 = sbr.rel (0) target = $region49
    $region48: #{tpu_custom_call.1} parent=1 // pred_region
      %946 = dma.done [#allocation5], 256
    $region49: #{tpu_custom_call.1} parent=1 // pred_fallthru
      _
    %947 = vsyncpa [#allocation4], 1
    %948 = vsyncpa [#allocation7], 1
    %949 = vsyncpa [#allocation5], 1

</llo_original>
